<compile_context>
chip_gen: v7x
topology: tpu7x:2x2x1
jax: 0.10.0
libtpu: 0.0.40
codegen_flags: <defaults>
</compile_context>

<pallas_src>
import functools

import jax
import jax.numpy as jnp
from jax.experimental import pallas as pl
from jax.experimental.pallas import tpu as pltpu


# ---------------------------------------------------------------------------
# Fused encoder + decoder kernel: one (batch-tile, channel-tile) grid step.
# ---------------------------------------------------------------------------
def _fused_sae_kernel(x_ref, we_ref, be_ref, wd_ref, bd_ref, out_ref, p_ref, *,
                      cb, latent, compute_dtype):
    # x_ref : (cb, tb, HW)  channel-leading input slab (leading-axis slices = free views)
    # we_ref: (cb, HW, L)   channel-leading encoder weights
    # be_ref: (1, L)        encoder bias
    # wd_ref: (cb*L, D)     decoder weights packed so row cc*L + l matches p_ref columns
    # bd_ref: (1, D)        decoder bias
    # out_ref:(tb, D) f32   decoder output; block index constant over channel axis
    #                       -> VMEM-resident accumulator (no scratch needed)
    # p_ref : (tb, cb*L)    lane-dense packed P block, column = cc*L + l
    c_step = pl.program_id(1)
    tb = out_ref.shape[0]

    @pl.when(c_step == 0)
    def _init():
        out_ref[...] = jnp.broadcast_to(bd_ref[...], out_ref.shape).astype(out_ref.dtype)

    # Hoist the encoder-bias broadcast out of the per-channel loop.
    b_enc = jnp.broadcast_to(be_ref[...], (tb, latent)).astype(jnp.float32)

    # Encoder: one MXU matmul per channel of the tile, stored straight into the
    # packed P output block. Static unroll (cb is capped small by the picker);
    # each iteration stores immediately, so live ranges stay bounded.
    for cc in range(cb):
        x_c = x_ref[cc].astype(compute_dtype)          # (tb, HW) free view
        w_c = we_ref[cc].astype(compute_dtype)         # (HW, L)  free view
        p_c = jnp.dot(x_c, w_c, preferred_element_type=jnp.float32) + b_enc
        p_ref[:, cc * latent:(cc + 1) * latent] = p_c.astype(p_ref.dtype)

    # Decoder: ONE deep-K matmul for the whole channel tile (K = cb*L),
    # accumulated directly into the resident f32 output block.  The decoder
    # consumes the *stored* P values, so `out` is exactly a linear function of
    # the returned P (modulo the compute_dtype cast).
    out_ref[...] += jnp.dot(p_ref[...].astype(compute_dtype),
                            wd_ref[...].astype(compute_dtype),
                            preferred_element_type=jnp.float32)


# ---------------------------------------------------------------------------
# Block / VMEM sizing helpers
# ---------------------------------------------------------------------------
def _divisors_desc(n, cap):
    cap = max(min(n, cap), 0)
    return [d for d in range(cap, 0, -1) if n % d == 0]


def _pick_batch_block(B, target=256):
    cands = [d for d in _divisors_desc(B, target) if d % 8 == 0 or d == B]
    tb = cands[0] if cands else B
    # Keep >= 2 batch grid steps when possible so the "parallel" axis can be
    # sharded across v7x's two TensorCores.
    if B // tb < 2:
        smaller = [d for d in _divisors_desc(B, B // 2) if d % 8 == 0]
        if smaller:
            tb = smaller[0]
    return tb


def _grid_step_vmem_bytes(tb, cb, HW, L, D, x_isz, w_isz, p_isz):
    x_blk = cb * tb * HW * x_isz
    we_blk = cb * HW * L * w_isz
    wd_blk = cb * L * D * w_isz
    p_blk = tb * cb * L * p_isz
    out_blk = tb * D * 4
    # inputs and the P output are double-buffered by the auto-pipeliner
    return 2 * (x_blk + we_blk + wd_blk + p_blk) + out_blk + (L + D) * 4


def _physical_vmem_bytes():
    try:
        info = pltpu.get_tpu_info()
        return int(getattr(info, "vmem_capacity_bytes", 128 * 1024 * 1024))
    except Exception:  # fall back to the v5e/v6e size if the query fails
        return 128 * 1024 * 1024


def _pick_channel_block(C, L, tb, HW, D, x_isz, w_isz, p_isz, budget, target=32):
    # cb must divide C, and the packed P block (tb, cb*L) must be lane-dense:
    # cb*L a multiple of 128 (or cover the whole C*L axis).  `target` also caps
    # the static unroll length in the kernel.
    cands = [d for d in _divisors_desc(C, min(C, target))
             if (d * L) % 128 == 0 or d == C]
    if not cands:
        cands = [C]
    for cb in cands:  # largest tile that fits the VMEM budget
        if _grid_step_vmem_bytes(tb, cb, HW, L, D, x_isz, w_isz, p_isz) <= budget:
            return cb
    return cands[-1]


# ---------------------------------------------------------------------------
# One-time weight preparation (hoist out of the per-step forward / cache it)
# ---------------------------------------------------------------------------
def prepare_params(params, *, weight_dtype=jnp.float32):
    w_enc = params["w_enc"]                       # (HW, C, L) == pixel_weights_encoder
    HW, C, L = w_enc.shape
    w_dec = params["w_dec"]                       # (D, L*HW)  == decoder.weight
    D = w_dec.shape[0]
    if w_dec.shape[1] != L * HW:
        raise ValueError("w_dec in_features must equal latent_channels * H * W")
    # channel-leading encoder weights: (C, HW, L)
    w_enc_r = jnp.transpose(w_enc, (1, 0, 2)).astype(weight_dtype)
    # packed decoder weights: w_dec2[i*L + l, d] == w_dec[d, l*HW + i]
    w_dec2 = (jnp.transpose(w_dec.reshape(D, L, HW), (2, 1, 0))
              .reshape(C * L, D).astype(weight_dtype))
    return {
        "w_enc_r": w_enc_r,
        "w_dec2": w_dec2,
        "b_enc": params["b_enc"].reshape(1, L).astype(jnp.float32),
        "b_dec": params["b_dec"].reshape(1, D).astype(jnp.float32),
    }


# ---------------------------------------------------------------------------
# Forward (single fused pallas_call)
# ---------------------------------------------------------------------------
def sparse_autoencoder_forward(x, prepared, *, channel_block=None, batch_block=None,
                               compute_dtype=jnp.float32, p_dtype=jnp.float32,
                               p_layout="module"):
    if p_layout not in ("module", "raw"):
        raise ValueError("p_layout must be 'module' or 'raw'")
    B, C, H, W = x.shape
    HW = H * W
    if C != HW:
        raise ValueError("reference forward requires input_size[0] == H*W")

    w_enc_r = prepared["w_enc_r"]                 # (C, HW, L)
    w_dec2 = prepared["w_dec2"]                   # (C*L, D)
    b_enc = prepared["b_enc"]                     # (1, L)
    b_dec = prepared["b_dec"]                     # (1, D)
    if w_enc_r.shape[0] != C or w_enc_r.shape[1] != HW:
        raise ValueError("prepared w_enc_r does not match input shape")
    L = w_enc_r.shape[2]
    D = w_dec2.shape[1]

    # Channel-leading activations (C, B, HW): one transpose pass over x is
    # cheaper than per-channel sublane-strided slices inside every grid step.
    x_cbh = jnp.transpose(x.reshape(B, C, HW), (1, 0, 2)).astype(compute_dtype)

    x_isz = jnp.dtype(compute_dtype).itemsize
    w_isz = jnp.dtype(w_enc_r.dtype).itemsize
    p_isz = jnp.dtype(p_dtype).itemsize

    phys_vmem = _physical_vmem_bytes()
    budget = min(int(0.70 * phys_vmem), 100 * 1024 * 1024)

    tb = batch_block if batch_block is not None else _pick_batch_block(B)
    if B % tb or not (tb % 8 == 0 or tb == B):
        raise ValueError(f"bad batch_block {tb} for B={B}")
    cb = (channel_block if channel_block is not None
          else _pick_channel_block(C, L, tb, HW, D, x_isz, w_isz, p_isz, budget))
    if C % cb or not ((cb * L) % 128 == 0 or cb == C):
        raise ValueError(f"bad channel_block {cb} for C={C}, L={L}")

    need = _grid_step_vmem_bytes(tb, cb, HW, L, D, x_isz, w_isz, p_isz)
    vmem_limit = min(max(int(1.25 * need) + (2 << 20), 32 << 20),
                     int(0.90 * phys_vmem))

    grid = (B // tb, C // cb)
    kernel = functools.partial(_fused_sae_kernel, cb=cb, latent=L,
                               compute_dtype=compute_dtype)

    out, p_packed = pl.pallas_call(
        kernel,
        out_shape=(
            jax.ShapeDtypeStruct((B, D), jnp.float32),        # decoder output
            jax.ShapeDtypeStruct((B, C * L), p_dtype),        # packed P
        ),
        grid=grid,
        in_specs=[
            pl.BlockSpec((cb, tb, HW), lambda b, c: (c, b, 0)),   # x (C, B, HW)
            pl.BlockSpec((cb, HW, L), lambda b, c: (c, 0, 0)),    # w_enc_r
            pl.BlockSpec((1, L), lambda b, c: (0, 0)),            # b_enc
            pl.BlockSpec((cb * L, D), lambda b, c: (c, 0)),       # w_dec2
            pl.BlockSpec((1, D), lambda b, c: (0, 0)),            # b_dec
        ],
        out_specs=(
            pl.BlockSpec((tb, D), lambda b, c: (b, 0)),           # resident accumulator
            pl.BlockSpec((tb, cb * L), lambda b, c: (b, c)),      # lane-dense P block
        ),
        compiler_params=pltpu.CompilerParams(
            dimension_semantics=("parallel", "arbitrary"),
            vmem_limit_bytes=vmem_limit,
        ),
    )(x_cbh, w_enc_r, b_enc, w_dec2, b_dec)

    if p_layout == "raw":
        # Free reshape only: P[b, i, l] with i = h*W + w. The module only uses
        # P for mean(|P|) (layout-invariant), so this avoids an extra HBM pass
        # over the largest tensor produced.
        P = p_packed.reshape(B, C, L)
    else:
        # Exact module layout (B, L, H, W): P[b, l, h, w] = P_bih[b, h*W+w, l].
        P = jnp.transpose(p_packed.reshape(B, C, L), (0, 2, 1)).reshape(B, L, H, W)
    return out, P


# ---------------------------------------------------------------------------
# Pure-JAX reference of the same forward (for correctness checking)
# ---------------------------------------------------------------------------
def _reference_forward(x, params, latent_channels):
    B, C, H, W = x.shape
    HW = H * W
    x_flat = x.reshape(B, C, HW)
    P_bih = jnp.einsum("bic,cih->bih", x_flat, params["w_enc"]) + params["b_enc"]
    P = jnp.transpose(P_bih, (0, 2, 1)).reshape(B, latent_channels, H, W)
    out = P.reshape(B, -1) @ params["w_dec"].T + params["b_dec"]
    return out, P


if __name__ == "__main__":
    # Small shapes consistent with the module: input_size == (C, H, W), C == H*W.
    B, H, W = 16, 4, 8
    HW = H * W               # 32
    C = HW                   # 32
    L = 8                    # latent_channels
    D = HW                   # decoder output features

    key = jax.random.PRNGKey(0)
    k_x, k_we, k_be, k_wd, k_bd = jax.random.split(key, 5)
    x = jax.random.normal(k_x, (B, C, H, W), dtype=jnp.float32)
    params = {
        "w_enc": jax.random.normal(k_we, (HW, C, L), dtype=jnp.float32) * 0.1,
        "b_enc": jax.random.normal(k_be, (L,), dtype=jnp.float32) * 0.1,
        "w_dec": jax.random.normal(k_wd, (D, L * HW), dtype=jnp.float32) * 0.1,
        "b_dec": jax.random.normal(k_bd, (D,), dtype=jnp.float32) * 0.1,
    }

    out_ref, P_ref = _reference_forward(x, params, latent_channels=L)

    # ---- f32 path. channel_block=16 -> 2 channel steps (exercises the resident
    # accumulator); batch tile auto-picks 8 -> 2 batch steps ("parallel" axis).
    prepared = prepare_params(params)                       # one-time weight regroup
    fwd = jax.jit(functools.partial(sparse_autoencoder_forward, channel_block=16))
    out, P = fwd(x, prepared)
    out = jax.block_until_ready(out)
    P = jax.block_until_ready(P)
    assert out.shape == (B, D) and P.shape == (B, L, H, W)
    assert jnp.allclose(out, out_ref, atol=1e-3, rtol=1e-3)
    assert jnp.allclose(P, P_ref, atol=1e-3, rtol=1e-3)

    # ---- bf16 MXU path (bf16 weights/activations/P, f32 accumulation),
    # transpose-free raw P layout.
    prepared_bf16 = prepare_params(params, weight_dtype=jnp.bfloat16)
    fwd_bf16 = jax.jit(functools.partial(
        sparse_autoencoder_forward, channel_block=16,
        compute_dtype=jnp.bfloat16, p_dtype=jnp.bfloat16, p_layout="raw"))
    out_b, P_b = fwd_bf16(x, prepared_bf16)
    out_b = jax.block_until_ready(out_b)
    P_b = jax.block_until_ready(P_b)
    assert out_b.shape == (B, D) and P_b.shape == (B, C, L)
    P_ref_raw = jnp.transpose(P_ref.reshape(B, L, C), (0, 2, 1))
    assert jnp.allclose(out_b, out_ref, atol=5e-2, rtol=5e-2)
    assert jnp.allclose(P_b.astype(jnp.float32), P_ref_raw, atol=5e-2, rtol=5e-2)

    print("KERNEL_OK")
</pallas_src>

<mosaic_0001>
module attributes {stable_mosaic.version = 11 : i64} {
  func.func @_fused_sae_kernel(%arg0: i32, %arg1: i32, %arg2: memref<16x8x32xf32, #tpu.memory_space<vmem>>, %arg3: memref<16x32x8xf32, #tpu.memory_space<vmem>>, %arg4: memref<1x8xf32, #tpu.memory_space<vmem>>, %arg5: memref<128x32xf32, #tpu.memory_space<vmem>>, %arg6: memref<1x32xf32, #tpu.memory_space<vmem>>, %arg7: memref<8x32xf32, #tpu.memory_space<vmem>>, %arg8: memref<8x128xf32, #tpu.memory_space<vmem>>) attributes {dimension_semantics = [#tpu.dimension_semantics<parallel>, #tpu.dimension_semantics<arbitrary>], iteration_bounds = array<i64: 2, 2>, scalar_prefetch = 0 : i64, scratch_operands = 0 : i64, tpu.core_type = #tpu.core_type<tc>, window_params = [{transform_indices = @transform_0, window_bounds = array<i64: 16, 8, 32>}, {transform_indices = @transform_1, window_bounds = array<i64: 16, 32, 8>}, {pipeline_mode = #tpu.pipeline_mode<synchronous>, transform_indices = @transform_2, window_bounds = array<i64: 1, 8>}, {transform_indices = @transform_3, window_bounds = array<i64: 128, 32>}, {pipeline_mode = #tpu.pipeline_mode<synchronous>, transform_indices = @transform_4, window_bounds = array<i64: 1, 32>}, {transform_indices = @transform_5, window_bounds = array<i64: 8, 32>}, {transform_indices = @transform_6, window_bounds = array<i64: 8, 128>}]} {
    %c0_i32 = arith.constant 0 : i32
    %0 = arith.cmpi eq, %arg1, %c0_i32 : i32
    %1 = arith.extui %0 : i1 to i32
    %c0_i32_0 = arith.constant 0 : i32
    %2 = arith.cmpi ne, %1, %c0_i32_0 : i32
    scf.if %2 {
      %c0_125 = arith.constant 0 : index
      %c0_126 = arith.constant 0 : index
      %124 = vector.load %arg6[%c0_125, %c0_126] : memref<1x32xf32, #tpu.memory_space<vmem>>, vector<1x32xf32>
      %125 = vector.shape_cast %124 : vector<1x32xf32> to vector<1x32xf32>
      %126 = vector.broadcast %125 : vector<1x32xf32> to vector<8x32xf32>
      %c0_127 = arith.constant 0 : index
      %c0_128 = arith.constant 0 : index
      %127 = vector.load %arg7[%c0_127, %c0_128] : memref<8x32xf32, #tpu.memory_space<vmem>>, vector<8x32xf32>
      tpu.vector_store %arg7[%c0_127, %c0_128], %126 {strides = array<i32>} : memref<8x32xf32, #tpu.memory_space<vmem>>, vector<8x32xf32>,
    } else {
    }
    %c0 = arith.constant 0 : index
    %c0_1 = arith.constant 0 : index
    %3 = vector.load %arg4[%c0, %c0_1] : memref<1x8xf32, #tpu.memory_space<vmem>>, vector<1x8xf32>
    %4 = vector.shape_cast %3 : vector<1x8xf32> to vector<1x8xf32>
    %5 = vector.broadcast %4 : vector<1x8xf32> to vector<8x8xf32>
    %c0_2 = arith.constant 0 : index
    %c0_3 = arith.constant 0 : index
    %c0_4 = arith.constant 0 : index
    %6 = vector.load %arg2[%c0_2, %c0_3, %c0_4] : memref<16x8x32xf32, #tpu.memory_space<vmem>>, vector<1x8x32xf32>
    %7 = vector.shape_cast %6 : vector<1x8x32xf32> to vector<8x32xf32>
    %c0_5 = arith.constant 0 : index
    %c0_6 = arith.constant 0 : index
    %c0_7 = arith.constant 0 : index
    %8 = vector.load %arg3[%c0_5, %c0_6, %c0_7] : memref<16x32x8xf32, #tpu.memory_space<vmem>>, vector<1x32x8xf32>
    %9 = vector.shape_cast %8 : vector<1x32x8xf32> to vector<32x8xf32>
    %cst = arith.constant dense<0.000000e+00> : vector<8x8xf32>
    %10 = tpu.matmul %7, %9, %cst {dimension_numbers = #tpu.dot_dimension_numbers<[1], [0], [0], [1], [0, 0, 1, 1], [], []>} : vector<8x32xf32>, vector<32x8xf32>, vector<8x8xf32> -> vector<8x8xf32>
    %11 = arith.addf %10, %5 : vector<8x8xf32>
    %c0_8 = arith.constant 0 : index
    %c0_9 = arith.constant 0 : index
    %12 = vector.load %arg8[%c0_8, %c0_9] : memref<8x128xf32, #tpu.memory_space<vmem>>, vector<8x8xf32>
    tpu.vector_store %arg8[%c0_8, %c0_9], %11 {strides = array<i32>} : memref<8x128xf32, #tpu.memory_space<vmem>>, vector<8x8xf32>,
    %c1 = arith.constant 1 : index
    %c0_10 = arith.constant 0 : index
    %c0_11 = arith.constant 0 : index
    %13 = vector.load %arg2[%c1, %c0_10, %c0_11] : memref<16x8x32xf32, #tpu.memory_space<vmem>>, vector<1x8x32xf32>
    %14 = vector.shape_cast %13 : vector<1x8x32xf32> to vector<8x32xf32>
    %c1_12 = arith.constant 1 : index
    %c0_13 = arith.constant 0 : index
    %c0_14 = arith.constant 0 : index
    %15 = vector.load %arg3[%c1_12, %c0_13, %c0_14] : memref<16x32x8xf32, #tpu.memory_space<vmem>>, vector<1x32x8xf32>
    %16 = vector.shape_cast %15 : vector<1x32x8xf32> to vector<32x8xf32>
    %cst_15 = arith.constant dense<0.000000e+00> : vector<8x8xf32>
    %17 = tpu.matmul %14, %16, %cst_15 {dimension_numbers = #tpu.dot_dimension_numbers<[1], [0], [0], [1], [0, 0, 1, 1], [], []>} : vector<8x32xf32>, vector<32x8xf32>, vector<8x8xf32> -> vector<8x8xf32>
    %18 = arith.addf %17, %5 : vector<8x8xf32>
    %c0_16 = arith.constant 0 : index
    %c8 = arith.constant 8 : index
    %19 = vector.load %arg8[%c0_16, %c8] : memref<8x128xf32, #tpu.memory_space<vmem>>, vector<8x8xf32>
    tpu.vector_store %arg8[%c0_16, %c8], %18 {strides = array<i32>} : memref<8x128xf32, #tpu.memory_space<vmem>>, vector<8x8xf32>,
    %c2 = arith.constant 2 : index
    %c0_17 = arith.constant 0 : index
    %c0_18 = arith.constant 0 : index
    %20 = vector.load %arg2[%c2, %c0_17, %c0_18] : memref<16x8x32xf32, #tpu.memory_space<vmem>>, vector<1x8x32xf32>
    %21 = vector.shape_cast %20 : vector<1x8x32xf32> to vector<8x32xf32>
    %c2_19 = arith.constant 2 : index
    %c0_20 = arith.constant 0 : index
    %c0_21 = arith.constant 0 : index
    %22 = vector.load %arg3[%c2_19, %c0_20, %c0_21] : memref<16x32x8xf32, #tpu.memory_space<vmem>>, vector<1x32x8xf32>
    %23 = vector.shape_cast %22 : vector<1x32x8xf32> to vector<32x8xf32>
    %cst_22 = arith.constant dense<0.000000e+00> : vector<8x8xf32>
    %24 = tpu.matmul %21, %23, %cst_22 {dimension_numbers = #tpu.dot_dimension_numbers<[1], [0], [0], [1], [0, 0, 1, 1], [], []>} : vector<8x32xf32>, vector<32x8xf32>, vector<8x8xf32> -> vector<8x8xf32>
    %25 = arith.addf %24, %5 : vector<8x8xf32>
    %c0_23 = arith.constant 0 : index
    %c16 = arith.constant 16 : index
    %26 = vector.load %arg8[%c0_23, %c16] : memref<8x128xf32, #tpu.memory_space<vmem>>, vector<8x8xf32>
    tpu.vector_store %arg8[%c0_23, %c16], %25 {strides = array<i32>} : memref<8x128xf32, #tpu.memory_space<vmem>>, vector<8x8xf32>,
    %c3 = arith.constant 3 : index
    %c0_24 = arith.constant 0 : index
    %c0_25 = arith.constant 0 : index
    %27 = vector.load %arg2[%c3, %c0_24, %c0_25] : memref<16x8x32xf32, #tpu.memory_space<vmem>>, vector<1x8x32xf32>
    %28 = vector.shape_cast %27 : vector<1x8x32xf32> to vector<8x32xf32>
    %c3_26 = arith.constant 3 : index
    %c0_27 = arith.constant 0 : index
    %c0_28 = arith.constant 0 : index
    %29 = vector.load %arg3[%c3_26, %c0_27, %c0_28] : memref<16x32x8xf32, #tpu.memory_space<vmem>>, vector<1x32x8xf32>
    %30 = vector.shape_cast %29 : vector<1x32x8xf32> to vector<32x8xf32>
    %cst_29 = arith.constant dense<0.000000e+00> : vector<8x8xf32>
    %31 = tpu.matmul %28, %30, %cst_29 {dimension_numbers = #tpu.dot_dimension_numbers<[1], [0], [0], [1], [0, 0, 1, 1], [], []>} : vector<8x32xf32>, vector<32x8xf32>, vector<8x8xf32> -> vector<8x8xf32>
    %32 = arith.addf %31, %5 : vector<8x8xf32>
    %c0_30 = arith.constant 0 : index
    %c24 = arith.constant 24 : index
    %33 = vector.load %arg8[%c0_30, %c24] : memref<8x128xf32, #tpu.memory_space<vmem>>, vector<8x8xf32>
    tpu.vector_store %arg8[%c0_30, %c24], %32 {strides = array<i32>} : memref<8x128xf32, #tpu.memory_space<vmem>>, vector<8x8xf32>,
    %c4 = arith.constant 4 : index
    %c0_31 = arith.constant 0 : index
    %c0_32 = arith.constant 0 : index
    %34 = vector.load %arg2[%c4, %c0_31, %c0_32] : memref<16x8x32xf32, #tpu.memory_space<vmem>>, vector<1x8x32xf32>
    %35 = vector.shape_cast %34 : vector<1x8x32xf32> to vector<8x32xf32>
    %c4_33 = arith.constant 4 : index
    %c0_34 = arith.constant 0 : index
    %c0_35 = arith.constant 0 : index
    %36 = vector.load %arg3[%c4_33, %c0_34, %c0_35] : memref<16x32x8xf32, #tpu.memory_space<vmem>>, vector<1x32x8xf32>
    %37 = vector.shape_cast %36 : vector<1x32x8xf32> to vector<32x8xf32>
    %cst_36 = arith.constant dense<0.000000e+00> : vector<8x8xf32>
    %38 = tpu.matmul %35, %37, %cst_36 {dimension_numbers = #tpu.dot_dimension_numbers<[1], [0], [0], [1], [0, 0, 1, 1], [], []>} : vector<8x32xf32>, vector<32x8xf32>, vector<8x8xf32> -> vector<8x8xf32>
    %39 = arith.addf %38, %5 : vector<8x8xf32>
    %c0_37 = arith.constant 0 : index
    %c32 = arith.constant 32 : index
    %40 = vector.load %arg8[%c0_37, %c32] : memref<8x128xf32, #tpu.memory_space<vmem>>, vector<8x8xf32>
    tpu.vector_store %arg8[%c0_37, %c32], %39 {strides = array<i32>} : memref<8x128xf32, #tpu.memory_space<vmem>>, vector<8x8xf32>,
    %c5 = arith.constant 5 : index
    %c0_38 = arith.constant 0 : index
    %c0_39 = arith.constant 0 : index
    %41 = vector.load %arg2[%c5, %c0_38, %c0_39] : memref<16x8x32xf32, #tpu.memory_space<vmem>>, vector<1x8x32xf32>
    %42 = vector.shape_cast %41 : vector<1x8x32xf32> to vector<8x32xf32>
    %c5_40 = arith.constant 5 : index
    %c0_41 = arith.constant 0 : index
    %c0_42 = arith.constant 0 : index
    %43 = vector.load %arg3[%c5_40, %c0_41, %c0_42] : memref<16x32x8xf32, #tpu.memory_space<vmem>>, vector<1x32x8xf32>
    %44 = vector.shape_cast %43 : vector<1x32x8xf32> to vector<32x8xf32>
    %cst_43 = arith.constant dense<0.000000e+00> : vector<8x8xf32>
    %45 = tpu.matmul %42, %44, %cst_43 {dimension_numbers = #tpu.dot_dimension_numbers<[1], [0], [0], [1], [0, 0, 1, 1], [], []>} : vector<8x32xf32>, vector<32x8xf32>, vector<8x8xf32> -> vector<8x8xf32>
    %46 = arith.addf %45, %5 : vector<8x8xf32>
    %c0_44 = arith.constant 0 : index
    %c40 = arith.constant 40 : index
    %47 = vector.load %arg8[%c0_44, %c40] : memref<8x128xf32, #tpu.memory_space<vmem>>, vector<8x8xf32>
    tpu.vector_store %arg8[%c0_44, %c40], %46 {strides = array<i32>} : memref<8x128xf32, #tpu.memory_space<vmem>>, vector<8x8xf32>,
    %c6 = arith.constant 6 : index
    %c0_45 = arith.constant 0 : index
    %c0_46 = arith.constant 0 : index
    %48 = vector.load %arg2[%c6, %c0_45, %c0_46] : memref<16x8x32xf32, #tpu.memory_space<vmem>>, vector<1x8x32xf32>
    %49 = vector.shape_cast %48 : vector<1x8x32xf32> to vector<8x32xf32>
    %c6_47 = arith.constant 6 : index
    %c0_48 = arith.constant 0 : index
    %c0_49 = arith.constant 0 : index
    %50 = vector.load %arg3[%c6_47, %c0_48, %c0_49] : memref<16x32x8xf32, #tpu.memory_space<vmem>>, vector<1x32x8xf32>
    %51 = vector.shape_cast %50 : vector<1x32x8xf32> to vector<32x8xf32>
    %cst_50 = arith.constant dense<0.000000e+00> : vector<8x8xf32>
    %52 = tpu.matmul %49, %51, %cst_50 {dimension_numbers = #tpu.dot_dimension_numbers<[1], [0], [0], [1], [0, 0, 1, 1], [], []>} : vector<8x32xf32>, vector<32x8xf32>, vector<8x8xf32> -> vector<8x8xf32>
    %53 = arith.addf %52, %5 : vector<8x8xf32>
    %c0_51 = arith.constant 0 : index
    %c48 = arith.constant 48 : index
    %54 = vector.load %arg8[%c0_51, %c48] : memref<8x128xf32, #tpu.memory_space<vmem>>, vector<8x8xf32>
    tpu.vector_store %arg8[%c0_51, %c48], %53 {strides = array<i32>} : memref<8x128xf32, #tpu.memory_space<vmem>>, vector<8x8xf32>,
    %c7 = arith.constant 7 : index
    %c0_52 = arith.constant 0 : index
    %c0_53 = arith.constant 0 : index
    %55 = vector.load %arg2[%c7, %c0_52, %c0_53] : memref<16x8x32xf32, #tpu.memory_space<vmem>>, vector<1x8x32xf32>
    %56 = vector.shape_cast %55 : vector<1x8x32xf32> to vector<8x32xf32>
    %c7_54 = arith.constant 7 : index
    %c0_55 = arith.constant 0 : index
    %c0_56 = arith.constant 0 : index
    %57 = vector.load %arg3[%c7_54, %c0_55, %c0_56] : memref<16x32x8xf32, #tpu.memory_space<vmem>>, vector<1x32x8xf32>
    %58 = vector.shape_cast %57 : vector<1x32x8xf32> to vector<32x8xf32>
    %cst_57 = arith.constant dense<0.000000e+00> : vector<8x8xf32>
    %59 = tpu.matmul %56, %58, %cst_57 {dimension_numbers = #tpu.dot_dimension_numbers<[1], [0], [0], [1], [0, 0, 1, 1], [], []>} : vector<8x32xf32>, vector<32x8xf32>, vector<8x8xf32> -> vector<8x8xf32>
    %60 = arith.addf %59, %5 : vector<8x8xf32>
    %c0_58 = arith.constant 0 : index
    %c56 = arith.constant 56 : index
    %61 = vector.load %arg8[%c0_58, %c56] : memref<8x128xf32, #tpu.memory_space<vmem>>, vector<8x8xf32>
    tpu.vector_store %arg8[%c0_58, %c56], %60 {strides = array<i32>} : memref<8x128xf32, #tpu.memory_space<vmem>>, vector<8x8xf32>,
    %c8_59 = arith.constant 8 : index
    %c0_60 = arith.constant 0 : index
    %c0_61 = arith.constant 0 : index
    %62 = vector.load %arg2[%c8_59, %c0_60, %c0_61] : memref<16x8x32xf32, #tpu.memory_space<vmem>>, vector<1x8x32xf32>
    %63 = vector.shape_cast %62 : vector<1x8x32xf32> to vector<8x32xf32>
    %c8_62 = arith.constant 8 : index
    %c0_63 = arith.constant 0 : index
    %c0_64 = arith.constant 0 : index
    %64 = vector.load %arg3[%c8_62, %c0_63, %c0_64] : memref<16x32x8xf32, #tpu.memory_space<vmem>>, vector<1x32x8xf32>
    %65 = vector.shape_cast %64 : vector<1x32x8xf32> to vector<32x8xf32>
    %cst_65 = arith.constant dense<0.000000e+00> : vector<8x8xf32>
    %66 = tpu.matmul %63, %65, %cst_65 {dimension_numbers = #tpu.dot_dimension_numbers<[1], [0], [0], [1], [0, 0, 1, 1], [], []>} : vector<8x32xf32>, vector<32x8xf32>, vector<8x8xf32> -> vector<8x8xf32>
    %67 = arith.addf %66, %5 : vector<8x8xf32>
    %c0_66 = arith.constant 0 : index
    %c64 = arith.constant 64 : index
    %68 = vector.load %arg8[%c0_66, %c64] : memref<8x128xf32, #tpu.memory_space<vmem>>, vector<8x8xf32>
    tpu.vector_store %arg8[%c0_66, %c64], %67 {strides = array<i32>} : memref<8x128xf32, #tpu.memory_space<vmem>>, vector<8x8xf32>,
    %c9 = arith.constant 9 : index
    %c0_67 = arith.constant 0 : index
    %c0_68 = arith.constant 0 : index
    %69 = vector.load %arg2[%c9, %c0_67, %c0_68] : memref<16x8x32xf32, #tpu.memory_space<vmem>>, vector<1x8x32xf32>
    %70 = vector.shape_cast %69 : vector<1x8x32xf32> to vector<8x32xf32>
    %c9_69 = arith.constant 9 : index
    %c0_70 = arith.constant 0 : index
    %c0_71 = arith.constant 0 : index
    %71 = vector.load %arg3[%c9_69, %c0_70, %c0_71] : memref<16x32x8xf32, #tpu.memory_space<vmem>>, vector<1x32x8xf32>
    %72 = vector.shape_cast %71 : vector<1x32x8xf32> to vector<32x8xf32>
    %cst_72 = arith.constant dense<0.000000e+00> : vector<8x8xf32>
    %73 = tpu.matmul %70, %72, %cst_72 {dimension_numbers = #tpu.dot_dimension_numbers<[1], [0], [0], [1], [0, 0, 1, 1], [], []>} : vector<8x32xf32>, vector<32x8xf32>, vector<8x8xf32> -> vector<8x8xf32>
    %74 = arith.addf %73, %5 : vector<8x8xf32>
    %c0_73 = arith.constant 0 : index
    %c72 = arith.constant 72 : index
    %75 = vector.load %arg8[%c0_73, %c72] : memref<8x128xf32, #tpu.memory_space<vmem>>, vector<8x8xf32>
    tpu.vector_store %arg8[%c0_73, %c72], %74 {strides = array<i32>} : memref<8x128xf32, #tpu.memory_space<vmem>>, vector<8x8xf32>,
    %c10 = arith.constant 10 : index
    %c0_74 = arith.constant 0 : index
    %c0_75 = arith.constant 0 : index
    %76 = vector.load %arg2[%c10, %c0_74, %c0_75] : memref<16x8x32xf32, #tpu.memory_space<vmem>>, vector<1x8x32xf32>
    %77 = vector.shape_cast %76 : vector<1x8x32xf32> to vector<8x32xf32>
    %c10_76 = arith.constant 10 : index
    %c0_77 = arith.constant 0 : index
    %c0_78 = arith.constant 0 : index
    %78 = vector.load %arg3[%c10_76, %c0_77, %c0_78] : memref<16x32x8xf32, #tpu.memory_space<vmem>>, vector<1x32x8xf32>
    %79 = vector.shape_cast %78 : vector<1x32x8xf32> to vector<32x8xf32>
    %cst_79 = arith.constant dense<0.000000e+00> : vector<8x8xf32>
    %80 = tpu.matmul %77, %79, %cst_79 {dimension_numbers = #tpu.dot_dimension_numbers<[1], [0], [0], [1], [0, 0, 1, 1], [], []>} : vector<8x32xf32>, vector<32x8xf32>, vector<8x8xf32> -> vector<8x8xf32>
    %81 = arith.addf %80, %5 : vector<8x8xf32>
    %c0_80 = arith.constant 0 : index
    %c80 = arith.constant 80 : index
    %82 = vector.load %arg8[%c0_80, %c80] : memref<8x128xf32, #tpu.memory_space<vmem>>, vector<8x8xf32>
    tpu.vector_store %arg8[%c0_80, %c80], %81 {strides = array<i32>} : memref<8x128xf32, #tpu.memory_space<vmem>>, vector<8x8xf32>,
    %c11 = arith.constant 11 : index
    %c0_81 = arith.constant 0 : index
    %c0_82 = arith.constant 0 : index
    %83 = vector.load %arg2[%c11, %c0_81, %c0_82] : memref<16x8x32xf32, #tpu.memory_space<vmem>>, vector<1x8x32xf32>
    %84 = vector.shape_cast %83 : vector<1x8x32xf32> to vector<8x32xf32>
    %c11_83 = arith.constant 11 : index
    %c0_84 = arith.constant 0 : index
    %c0_85 = arith.constant 0 : index
    %85 = vector.load %arg3[%c11_83, %c0_84, %c0_85] : memref<16x32x8xf32, #tpu.memory_space<vmem>>, vector<1x32x8xf32>
    %86 = vector.shape_cast %85 : vector<1x32x8xf32> to vector<32x8xf32>
    %cst_86 = arith.constant dense<0.000000e+00> : vector<8x8xf32>
    %87 = tpu.matmul %84, %86, %cst_86 {dimension_numbers = #tpu.dot_dimension_numbers<[1], [0], [0], [1], [0, 0, 1, 1], [], []>} : vector<8x32xf32>, vector<32x8xf32>, vector<8x8xf32> -> vector<8x8xf32>
    %88 = arith.addf %87, %5 : vector<8x8xf32>
    %c0_87 = arith.constant 0 : index
    %c88 = arith.constant 88 : index
    %89 = vector.load %arg8[%c0_87, %c88] : memref<8x128xf32, #tpu.memory_space<vmem>>, vector<8x8xf32>
    tpu.vector_store %arg8[%c0_87, %c88], %88 {strides = array<i32>} : memref<8x128xf32, #tpu.memory_space<vmem>>, vector<8x8xf32>,
    %c12 = arith.constant 12 : index
    %c0_88 = arith.constant 0 : index
    %c0_89 = arith.constant 0 : index
    %90 = vector.load %arg2[%c12, %c0_88, %c0_89] : memref<16x8x32xf32, #tpu.memory_space<vmem>>, vector<1x8x32xf32>
    %91 = vector.shape_cast %90 : vector<1x8x32xf32> to vector<8x32xf32>
    %c12_90 = arith.constant 12 : index
    %c0_91 = arith.constant 0 : index
    %c0_92 = arith.constant 0 : index
    %92 = vector.load %arg3[%c12_90, %c0_91, %c0_92] : memref<16x32x8xf32, #tpu.memory_space<vmem>>, vector<1x32x8xf32>
    %93 = vector.shape_cast %92 : vector<1x32x8xf32> to vector<32x8xf32>
    %cst_93 = arith.constant dense<0.000000e+00> : vector<8x8xf32>
    %94 = tpu.matmul %91, %93, %cst_93 {dimension_numbers = #tpu.dot_dimension_numbers<[1], [0], [0], [1], [0, 0, 1, 1], [], []>} : vector<8x32xf32>, vector<32x8xf32>, vector<8x8xf32> -> vector<8x8xf32>
    %95 = arith.addf %94, %5 : vector<8x8xf32>
    %c0_94 = arith.constant 0 : index
    %c96 = arith.constant 96 : index
    %96 = vector.load %arg8[%c0_94, %c96] : memref<8x128xf32, #tpu.memory_space<vmem>>, vector<8x8xf32>
    tpu.vector_store %arg8[%c0_94, %c96], %95 {strides = array<i32>} : memref<8x128xf32, #tpu.memory_space<vmem>>, vector<8x8xf32>,
    %c13 = arith.constant 13 : index
    %c0_95 = arith.constant 0 : index
    %c0_96 = arith.constant 0 : index
    %97 = vector.load %arg2[%c13, %c0_95, %c0_96] : memref<16x8x32xf32, #tpu.memory_space<vmem>>, vector<1x8x32xf32>
    %98 = vector.shape_cast %97 : vector<1x8x32xf32> to vector<8x32xf32>
    %c13_97 = arith.constant 13 : index
    %c0_98 = arith.constant 0 : index
    %c0_99 = arith.constant 0 : index
    %99 = vector.load %arg3[%c13_97, %c0_98, %c0_99] : memref<16x32x8xf32, #tpu.memory_space<vmem>>, vector<1x32x8xf32>
    %100 = vector.shape_cast %99 : vector<1x32x8xf32> to vector<32x8xf32>
    %cst_100 = arith.constant dense<0.000000e+00> : vector<8x8xf32>
    %101 = tpu.matmul %98, %100, %cst_100 {dimension_numbers = #tpu.dot_dimension_numbers<[1], [0], [0], [1], [0, 0, 1, 1], [], []>} : vector<8x32xf32>, vector<32x8xf32>, vector<8x8xf32> -> vector<8x8xf32>
    %102 = arith.addf %101, %5 : vector<8x8xf32>
    %c0_101 = arith.constant 0 : index
    %c104 = arith.constant 104 : index
    %103 = vector.load %arg8[%c0_101, %c104] : memref<8x128xf32, #tpu.memory_space<vmem>>, vector<8x8xf32>
    tpu.vector_store %arg8[%c0_101, %c104], %102 {strides = array<i32>} : memref<8x128xf32, #tpu.memory_space<vmem>>, vector<8x8xf32>,
    %c14 = arith.constant 14 : index
    %c0_102 = arith.constant 0 : index
    %c0_103 = arith.constant 0 : index
    %104 = vector.load %arg2[%c14, %c0_102, %c0_103] : memref<16x8x32xf32, #tpu.memory_space<vmem>>, vector<1x8x32xf32>
    %105 = vector.shape_cast %104 : vector<1x8x32xf32> to vector<8x32xf32>
    %c14_104 = arith.constant 14 : index
    %c0_105 = arith.constant 0 : index
    %c0_106 = arith.constant 0 : index
    %106 = vector.load %arg3[%c14_104, %c0_105, %c0_106] : memref<16x32x8xf32, #tpu.memory_space<vmem>>, vector<1x32x8xf32>
    %107 = vector.shape_cast %106 : vector<1x32x8xf32> to vector<32x8xf32>
    %cst_107 = arith.constant dense<0.000000e+00> : vector<8x8xf32>
    %108 = tpu.matmul %105, %107, %cst_107 {dimension_numbers = #tpu.dot_dimension_numbers<[1], [0], [0], [1], [0, 0, 1, 1], [], []>} : vector<8x32xf32>, vector<32x8xf32>, vector<8x8xf32> -> vector<8x8xf32>
    %109 = arith.addf %108, %5 : vector<8x8xf32>
    %c0_108 = arith.constant 0 : index
    %c112 = arith.constant 112 : index
    %110 = vector.load %arg8[%c0_108, %c112] : memref<8x128xf32, #tpu.memory_space<vmem>>, vector<8x8xf32>
    tpu.vector_store %arg8[%c0_108, %c112], %109 {strides = array<i32>} : memref<8x128xf32, #tpu.memory_space<vmem>>, vector<8x8xf32>,
    %c15 = arith.constant 15 : index
    %c0_109 = arith.constant 0 : index
    %c0_110 = arith.constant 0 : index
    %111 = vector.load %arg2[%c15, %c0_109, %c0_110] : memref<16x8x32xf32, #tpu.memory_space<vmem>>, vector<1x8x32xf32>
    %112 = vector.shape_cast %111 : vector<1x8x32xf32> to vector<8x32xf32>
    %c15_111 = arith.constant 15 : index
    %c0_112 = arith.constant 0 : index
    %c0_113 = arith.constant 0 : index
    %113 = vector.load %arg3[%c15_111, %c0_112, %c0_113] : memref<16x32x8xf32, #tpu.memory_space<vmem>>, vector<1x32x8xf32>
    %114 = vector.shape_cast %113 : vector<1x32x8xf32> to vector<32x8xf32>
    %cst_114 = arith.constant dense<0.000000e+00> : vector<8x8xf32>
    %115 = tpu.matmul %112, %114, %cst_114 {dimension_numbers = #tpu.dot_dimension_numbers<[1], [0], [0], [1], [0, 0, 1, 1], [], []>} : vector<8x32xf32>, vector<32x8xf32>, vector<8x8xf32> -> vector<8x8xf32>
    %116 = arith.addf %115, %5 : vector<8x8xf32>
    %c0_115 = arith.constant 0 : index
    %c120 = arith.constant 120 : index
    %117 = vector.load %arg8[%c0_115, %c120] : memref<8x128xf32, #tpu.memory_space<vmem>>, vector<8x8xf32>
    tpu.vector_store %arg8[%c0_115, %c120], %116 {strides = array<i32>} : memref<8x128xf32, #tpu.memory_space<vmem>>, vector<8x8xf32>,
    %c0_116 = arith.constant 0 : index
    %c0_117 = arith.constant 0 : index
    %118 = vector.load %arg7[%c0_116, %c0_117] : memref<8x32xf32, #tpu.memory_space<vmem>>, vector<8x32xf32>
    %c0_118 = arith.constant 0 : index
    %c0_119 = arith.constant 0 : index
    %119 = vector.load %arg8[%c0_118, %c0_119] : memref<8x128xf32, #tpu.memory_space<vmem>>, vector<8x128xf32>
    %c0_120 = arith.constant 0 : index
    %c0_121 = arith.constant 0 : index
    %120 = vector.load %arg5[%c0_120, %c0_121] : memref<128x32xf32, #tpu.memory_space<vmem>>, vector<128x32xf32>
    %cst_122 = arith.constant dense<0.000000e+00> : vector<8x32xf32>
    %121 = tpu.matmul %119, %120, %cst_122 {dimension_numbers = #tpu.dot_dimension_numbers<[1], [0], [0], [1], [0, 0, 1, 1], [], []>} : vector<8x128xf32>, vector<128x32xf32>, vector<8x32xf32> -> vector<8x32xf32>
    %122 = arith.addf %118, %121 : vector<8x32xf32>
    %c0_123 = arith.constant 0 : index
    %c0_124 = arith.constant 0 : index
    %123 = vector.load %arg7[%c0_123, %c0_124] : memref<8x32xf32, #tpu.memory_space<vmem>>, vector<8x32xf32>
    tpu.vector_store %arg7[%c0_123, %c0_124], %122 {strides = array<i32>} : memref<8x32xf32, #tpu.memory_space<vmem>>, vector<8x32xf32>,
    return
  }
  func.func @transform_0(%arg0: i32, %arg1: i32) -> (i32, i32, i32) {
    %c0_i32 = arith.constant 0 : i32
    %c0_i32_0 = arith.constant 0 : i32
    return %arg1, %arg0, %c0_i32 : i32, i32, i32
  }
  func.func @transform_1(%arg0: i32, %arg1: i32) -> (i32, i32, i32) {
    %c0_i32 = arith.constant 0 : i32
    %c0_i32_0 = arith.constant 0 : i32
    %c0_i32_1 = arith.constant 0 : i32
    return %arg1, %c0_i32, %c0_i32_0 : i32, i32, i32
  }
  func.func @transform_2(%arg0: i32, %arg1: i32) -> (i32, i32) {
    %c0_i32 = arith.constant 0 : i32
    %c0_i32_0 = arith.constant 0 : i32
    %c0_i32_1 = arith.constant 0 : i32
    return %c0_i32, %c0_i32_0 : i32, i32
  }
  func.func @transform_3(%arg0: i32, %arg1: i32) -> (i32, i32) {
    %c0_i32 = arith.constant 0 : i32
    %c0_i32_0 = arith.constant 0 : i32
    return %arg1, %c0_i32 : i32, i32
  }
  func.func @transform_4(%arg0: i32, %arg1: i32) -> (i32, i32) {
    %c0_i32 = arith.constant 0 : i32
    %c0_i32_0 = arith.constant 0 : i32
    %c0_i32_1 = arith.constant 0 : i32
    return %c0_i32, %c0_i32_0 : i32, i32
  }
  func.func @transform_5(%arg0: i32, %arg1: i32) -> (i32, i32) {
    %c0_i32 = arith.constant 0 : i32
    %c0_i32_0 = arith.constant 0 : i32
    return %arg0, %c0_i32 : i32, i32
  }
  func.func @transform_6(%arg0: i32, %arg1: i32) -> (i32, i32) {
    %c0_i32 = arith.constant 0 : i32
    return %arg0, %arg1 : i32, i32
  }
}

</mosaic_0001>

<llo_original>
// kernel: sparse_autoencoder_forward.1
$region0: #{sparse_autoencoder_forward.1}
  #allocation0 [shape = 'u32[]', space=smem, size = 0x4, offset = 0x4, fixed_abs, tag = 'smem constant byte address 0x4 - core index']
  #allocation1 [shape = 'u32[144,128]{1,0:T(1,128)}', space=vmem, size = 0x12000, scoped, tag = 'internal scratch']
  %s0 = inlined_call_operand.vmem [shape: f32[32,16,32], index: 0, kind: input, shape index: {}]
  %s1 = inlined_call_operand.vmem [shape: f32[32,32,8], index: 1, kind: input, shape index: {}]
  %s2 = inlined_call_operand.vmem [shape: f32[1,8], index: 2, kind: input, shape index: {}]
  %s3 = inlined_call_operand.vmem [shape: f32[256,32], index: 3, kind: input, shape index: {}]
  %s4 = inlined_call_operand.vmem [shape: f32[1,32], index: 4, kind: input, shape index: {}]
  %s5 = inlined_call_operand.hbm [shape: f32[16,32], index: 5, kind: output, shape index: {0}]
  %s6 = inlined_call_operand.vmem [shape: f32[16,256], index: 6, kind: output, shape index: {1}]
  %7 = xla_tuple %s5, %s6
  %s8 = sld [smem:[#allocation0]]
  $region103: #{sparse_autoencoder_forward.1} parent=0
    _
  %s10 = ssub.s32 1, %s8
  %s11 = scalar_select 0, %s10, %s8
  $region1: #{sparse_autoencoder_forward.1} parent=0
    #allocation2 [shape = 'u8[131072]{0}', space=vmem, size = 0x20000, scoped, tag = 'input window, operand 0']
    #allocation3 [shape = 'u8[8192]{0}', space=vmem, size = 0x2000, scoped, tag = 'output window, operand 0']
    #allocation4 [shape = 's32[2]{0}', space=sflag, size = 0x8, scoped, tag = 'scoped memory for sparse_autoencoder_forward.1']
    %12 = vsyncpa [#allocation4], 0
    %s13 = scalar_lea.sflag [#allocation4], 1
    %14 = vsyncpa %s13, 0
    loop: start=0, step=1, limit=6
    $region2: #{sparse_autoencoder_forward.1} parent=1 // loop_pre_header
      _
    $region3: #{sparse_autoencoder_forward.1} parent=1 // loop_header
      %s16 = sphi 0, %s20
      %p17 = scmp.ge.s32.totalorder %s16, 6
      %s23 = sphi 0, %s35
      %s24 = sphi 0, %s31
      %s25 = sphi 0, %s23
      %s26 = sphi 0, %s24
      %s27 = sphi 0, %s25
      %s28 = sphi 0, %s26
      %s40 = sphi 0, %s42
      %s43 = sphi 0, %s40
      %s44 = sphi 0, %s43
      %s60 = sphi 0, %s44
      %s66 = sphi 0, %s68
      %s69 = sphi 0, %s66
      %s70 = sphi 0, %s69
      %s86 = sphi 0, %s70
      %s90 = sphi 0, %s90
      %s92 = sphi 0, %s90
      %s93 = sphi 0, %s92
      %s107 = sphi 0, %s93
      %s113 = sphi 0, %s115
      %s116 = sphi 0, %s113
      %s117 = sphi 0, %s116
      %s133 = sphi 0, %s117
      %s137 = sphi 0, %s137
      %s139 = sphi 0, %s137
      %s140 = sphi 0, %s139
      %s154 = sphi 0, %s140
      %s160 = sphi 0, %s162
      %s163 = sphi 0, %s160
      %s164 = sphi 0, %s163
      %s180 = sphi 0, %s164
      %s188 = sphi 0, %s190
      %s191 = sphi 0, %s188
      %s192 = sphi 0, %s191
      %s208 = sphi 0, %s192
    $region4: #{sparse_autoencoder_forward.1} parent=1 // loop_header_branch
      %19 = sbr.rel (%p17) target = $region8
    $region5: #{sparse_autoencoder_forward.1} parent=1 // loop_body
      %s21 = ssub.s32 %s16, 1
      %s22 = ssub.s32 %s16, 2
      %s29 = sadd.s32 1, %s24
      %p30 = scmp.ge.s32.totalorder %s29, 2
      %s31 = scalar_select %p30, 0, %s29
      %s32 = sadd.s32 1, %s23
      %s33 = scalar_select %p30, %s32, %s23
      %p34 = scmp.ge.s32.totalorder %s33, 2
      %s35 = scalar_select %p34, 0, %s33
      %s36 = ssub.s32 %s24, %s31
      %s37 = ssub.s32 %s23, %s35
      %s38 = sor.u32 %s36, %s37
      %p39 = scmp.eq.s32.totalorder %s38, 0
      %s41 = sadd.s32 %s40, 1
      %s42 = scalar_select %p39, %s40, %s41
      %p45 = pneg %p39
      %p46 = scmp.eq.s32.totalorder %s16, 3
      %p47 = por %p45, %p46
      %p48 = scmp.ne.s32.totalorder %s40, %s43
      %p49 = scmp.eq.s32.totalorder %s16, 0
      %p50 = por %p48, %p49
      %p51 = scmp.ne.s32.totalorder %s40, %s43
      %p52 = scmp.eq.s32.totalorder %s21, 3
      %p53 = por %p51, %p52
      %p54 = scmp.ne.s32.totalorder %s43, %s44
      %p55 = scmp.eq.s32.totalorder %s21, 0
      %p56 = por %p54, %p55
      %p57 = scmp.ne.s32.totalorder %s43, %s44
      %p58 = scmp.eq.s32.totalorder %s22, 3
      %p59 = por %p57, %p58
      %p61 = scmp.ne.s32.totalorder %s44, %s60
      %p62 = scmp.eq.s32.totalorder %s22, 0
      %p63 = por %p61, %p62
      %s64 = ssub.s32 %s24, %s31
      %p65 = scmp.eq.s32.totalorder %s64, 0
      %s67 = sadd.s32 %s66, 1
      %s68 = scalar_select %p65, %s66, %s67
      %p71 = pneg %p65
      %p72 = scmp.eq.s32.totalorder %s16, 3
      %p73 = por %p71, %p72
      %p74 = scmp.ne.s32.totalorder %s66, %s69
      %p75 = scmp.eq.s32.totalorder %s16, 0
      %p76 = por %p74, %p75
      %p77 = scmp.ne.s32.totalorder %s66, %s69
      %p78 = scmp.eq.s32.totalorder %s21, 3
      %p79 = por %p77, %p78
      %p80 = scmp.ne.s32.totalorder %s69, %s70
      %p81 = scmp.eq.s32.totalorder %s21, 0
      %p82 = por %p80, %p81
      %p83 = scmp.ne.s32.totalorder %s69, %s70
      %p84 = scmp.eq.s32.totalorder %s22, 3
      %p85 = por %p83, %p84
      %p87 = scmp.ne.s32.totalorder %s70, %s86
      %p88 = scmp.eq.s32.totalorder %s22, 0
      %p89 = por %p87, %p88
      %s91 = sadd.s32 %s90, 1
      %p94 = scmp.eq.s32.totalorder %s16, 3
      %p95 = scmp.ne.s32.totalorder %s90, %s92
      %p96 = scmp.eq.s32.totalorder %s16, 0
      %p97 = por %p95, %p96
      %p98 = scmp.ne.s32.totalorder %s90, %s92
      %p99 = scmp.eq.s32.totalorder %s21, 3
      %p100 = por %p98, %p99
      %p101 = scmp.ne.s32.totalorder %s92, %s93
      %p102 = scmp.eq.s32.totalorder %s21, 0
      %p103 = por %p101, %p102
      %p104 = scmp.ne.s32.totalorder %s92, %s93
      %p105 = scmp.eq.s32.totalorder %s22, 3
      %p106 = por %p104, %p105
      %p108 = scmp.ne.s32.totalorder %s93, %s107
      %p109 = scmp.eq.s32.totalorder %s22, 0
      %p110 = por %p108, %p109
      %s111 = ssub.s32 %s24, %s31
      %p112 = scmp.eq.s32.totalorder %s111, 0
      %s114 = sadd.s32 %s113, 1
      %s115 = scalar_select %p112, %s113, %s114
      %p118 = pneg %p112
      %p119 = scmp.eq.s32.totalorder %s16, 3
      %p120 = por %p118, %p119
      %p121 = scmp.ne.s32.totalorder %s113, %s116
      %p122 = scmp.eq.s32.totalorder %s16, 0
      %p123 = por %p121, %p122
      %p124 = scmp.ne.s32.totalorder %s113, %s116
      %p125 = scmp.eq.s32.totalorder %s21, 3
      %p126 = por %p124, %p125
      %p127 = scmp.ne.s32.totalorder %s116, %s117
      %p128 = scmp.eq.s32.totalorder %s21, 0
      %p129 = por %p127, %p128
      %p130 = scmp.ne.s32.totalorder %s116, %s117
      %p131 = scmp.eq.s32.totalorder %s22, 3
      %p132 = por %p130, %p131
      %p134 = scmp.ne.s32.totalorder %s117, %s133
      %p135 = scmp.eq.s32.totalorder %s22, 0
      %p136 = por %p134, %p135
      %s138 = sadd.s32 %s137, 1
      %p141 = scmp.eq.s32.totalorder %s16, 3
      %p142 = scmp.ne.s32.totalorder %s137, %s139
      %p143 = scmp.eq.s32.totalorder %s16, 0
      %p144 = por %p142, %p143
      %p145 = scmp.ne.s32.totalorder %s137, %s139
      %p146 = scmp.eq.s32.totalorder %s21, 3
      %p147 = por %p145, %p146
      %p148 = scmp.ne.s32.totalorder %s139, %s140
      %p149 = scmp.eq.s32.totalorder %s21, 0
      %p150 = por %p148, %p149
      %p151 = scmp.ne.s32.totalorder %s139, %s140
      %p152 = scmp.eq.s32.totalorder %s22, 3
      %p153 = por %p151, %p152
      %p155 = scmp.ne.s32.totalorder %s140, %s154
      %p156 = scmp.eq.s32.totalorder %s22, 0
      %p157 = por %p155, %p156
      %s158 = ssub.s32 %s23, %s35
      %p159 = scmp.eq.s32.totalorder %s158, 0
      %s161 = sadd.s32 %s160, 1
      %s162 = scalar_select %p159, %s160, %s161
      %p165 = pneg %p159
      %p166 = scmp.eq.s32.totalorder %s16, 3
      %p167 = por %p165, %p166
      %p168 = scmp.ne.s32.totalorder %s160, %s163
      %p169 = scmp.eq.s32.totalorder %s16, 0
      %p170 = por %p168, %p169
      %p171 = scmp.ne.s32.totalorder %s160, %s163
      %p172 = scmp.eq.s32.totalorder %s21, 3
      %p173 = por %p171, %p172
      %p174 = scmp.ne.s32.totalorder %s163, %s164
      %p175 = scmp.eq.s32.totalorder %s21, 0
      %p176 = por %p174, %p175
      %p177 = scmp.ne.s32.totalorder %s163, %s164
      %p178 = scmp.eq.s32.totalorder %s22, 3
      %p179 = por %p177, %p178
      %p181 = scmp.ne.s32.totalorder %s164, %s180
      %p182 = scmp.eq.s32.totalorder %s22, 0
      %p183 = por %p181, %p182
      %s184 = ssub.s32 %s23, %s35
      %s185 = ssub.s32 %s24, %s31
      %s186 = sor.u32 %s184, %s185
      %p187 = scmp.eq.s32.totalorder %s186, 0
      %s189 = sadd.s32 %s188, 1
      %s190 = scalar_select %p187, %s188, %s189
      %p193 = pneg %p187
      %p194 = scmp.eq.s32.totalorder %s16, 3
      %p195 = por %p193, %p194
      %p196 = scmp.ne.s32.totalorder %s188, %s191
      %p197 = scmp.eq.s32.totalorder %s16, 0
      %p198 = por %p196, %p197
      %p199 = scmp.ne.s32.totalorder %s188, %s191
      %p200 = scmp.eq.s32.totalorder %s21, 3
      %p201 = por %p199, %p200
      %p202 = scmp.ne.s32.totalorder %s191, %s192
      %p203 = scmp.eq.s32.totalorder %s21, 0
      %p204 = por %p202, %p203
      %p205 = scmp.ne.s32.totalorder %s191, %s192
      %p206 = scmp.eq.s32.totalorder %s22, 3
      %p207 = por %p205, %p206
      %p209 = scmp.ne.s32.totalorder %s192, %s208
      %p210 = scmp.eq.s32.totalorder %s22, 0
      %p211 = por %p209, %p210
      %p212 = scmp.le.s32.totalorder 1, %s16
      %p213 = scmp.lt.s32.totalorder %s16, 5
      %p214 = pnand %p212, %p213
      %p215 = pneg %p214
      // Predicated region
      $region9: #{sparse_autoencoder_forward.1} parent=5 // pred_check
        _
      $region10: #{sparse_autoencoder_forward.1} parent=5 // pred_check_branch
        %217 = sbr.rel (%p214) target = $region12
      $region11: #{sparse_autoencoder_forward.1} parent=5 // pred_region
        %s218 = ssub.s32 %s16, 1
        // Predicated region
        $region13: #{sparse_autoencoder_forward.1} parent=11 // pred_check
          %p219 = pneg %p103
        $region14: #{sparse_autoencoder_forward.1} parent=11 // pred_check_branch
          %221 = sbr.rel (%p219) target = $region16
        $region15: #{sparse_autoencoder_forward.1} parent=11 // pred_region
          _
        $region16: #{sparse_autoencoder_forward.1} parent=11 // pred_fallthru
          _
        // Predicated region
        $region17: #{sparse_autoencoder_forward.1} parent=11 // pred_check
          %p222 = pneg %p150
        $region18: #{sparse_autoencoder_forward.1} parent=11 // pred_check_branch
          %224 = sbr.rel (%p222) target = $region20
        $region19: #{sparse_autoencoder_forward.1} parent=11 // pred_region
          _
        $region20: #{sparse_autoencoder_forward.1} parent=11 // pred_fallthru
          _
      $region12: #{sparse_autoencoder_forward.1} parent=5 // pred_fallthru
        _
      %p225 = scmp.lt.s32.totalorder %s16, 4
      // Predicated region
      $region21: #{sparse_autoencoder_forward.1} parent=5 // pred_check
        %p226 = pneg %p225
      $region22: #{sparse_autoencoder_forward.1} parent=5 // pred_check_branch
        %228 = sbr.rel (%p226) target = $region24
      $region23: #{sparse_autoencoder_forward.1} parent=5 // pred_region
        // Predicated region
        $region25: #{sparse_autoencoder_forward.1} parent=23 // pred_check
          %p229 = pneg %p50
        $region26: #{sparse_autoencoder_forward.1} parent=23 // pred_check_branch
          %231 = sbr.rel (%p229) target = $region28
        $region27: #{sparse_autoencoder_forward.1} parent=23 // pred_region
          %s232 = sand.u32 %s40, 1
          %s233 = sand.u32 %s40, 1
          %s234 = smul.addr %s233, 128
          %s235 = scalar_lea.vmem [#allocation2], %s234
          %s236 = smul.u32 16, %s24
          %s237 = smul.addr %s236, 2
          %s238 = sadd.s32 %s23, %s237
          %s239 = smul.addr %s238, 8
          %s240 = scalar_lea.vmem %s0, %s239
          // Predicated region
          $region29: #{sparse_autoencoder_forward.1} parent=27 // pred_check
            _
          $region30: #{sparse_autoencoder_forward.1} parent=27 // pred_check_branch
            %242 = sbr.rel (0) target = $region32
          $region31: #{sparse_autoencoder_forward.1} parent=27 // pred_region
            // Predicated region
            $region33: #{sparse_autoencoder_forward.1} parent=31 // pred_check
              _
            $region34: #{sparse_autoencoder_forward.1} parent=31 // pred_check_branch
              %244 = sbr.rel (0) target = $region36
            $region35: #{sparse_autoencoder_forward.1} parent=31 // pred_region
              // Predicated region
              $region48: #{sparse_autoencoder_forward.1} parent=35 // pred_check
                _
              $region49: #{sparse_autoencoder_forward.1} parent=35 // pred_check_branch
                %289 = sbr.rel (0) target = $region51
              $region50: #{sparse_autoencoder_forward.1} parent=35 // pred_region
                loop: start=0, step=1, limit=1
                $region52: #{sparse_autoencoder_forward.1} parent=50 // loop_pre_header
                  _
                $region53: #{sparse_autoencoder_forward.1} parent=50 // loop_header
                  %s291 = sphi 0, %s295
                  %p292 = scmp.ge.s32.totalorder %s291, 1
                  %s296 = sphi %s240, %s240
                  %s297 = sphi %s235, %s235
                $region54: #{sparse_autoencoder_forward.1} parent=50 // loop_header_branch
                  %294 = sbr.rel (%p292) target = $region58
                $region55: #{sparse_autoencoder_forward.1} parent=50 // loop_body
                  %v298 = vld [vmem:[%s296] sm:$0xff]
                  %299 = vst [vmem:[%s297] sm:$0xff] %v298
                  %v300 = vld [vmem:[%s296 + $0x10] sm:$0xff]
                  %301 = vst [vmem:[%s297 + $0x8] sm:$0xff] %v300
                  %v302 = vld [vmem:[%s296 + $0x20] sm:$0xff]
                  %303 = vst [vmem:[%s297 + $0x10] sm:$0xff] %v302
                  %v304 = vld [vmem:[%s296 + $0x30] sm:$0xff]
                  %305 = vst [vmem:[%s297 + $0x18] sm:$0xff] %v304
                  %v306 = vld [vmem:[%s296 + $0x40] sm:$0xff]
                  %307 = vst [vmem:[%s297 + $0x20] sm:$0xff] %v306
                  %v308 = vld [vmem:[%s296 + $0x50] sm:$0xff]
                  %309 = vst [vmem:[%s297 + $0x28] sm:$0xff] %v308
                  %v310 = vld [vmem:[%s296 + $0x60] sm:$0xff]
                  %311 = vst [vmem:[%s297 + $0x30] sm:$0xff] %v310
                  %v312 = vld [vmem:[%s296 + $0x70] sm:$0xff]
                  %313 = vst [vmem:[%s297 + $0x38] sm:$0xff] %v312
                  %v314 = vld [vmem:[%s296 + $0x80] sm:$0xff]
                  %315 = vst [vmem:[%s297 + $0x40] sm:$0xff] %v314
                  %v316 = vld [vmem:[%s296 + $0x90] sm:$0xff]
                  %317 = vst [vmem:[%s297 + $0x48] sm:$0xff] %v316
                  %v318 = vld [vmem:[%s296 + $0xa0] sm:$0xff]
                  %319 = vst [vmem:[%s297 + $0x50] sm:$0xff] %v318
                  %v320 = vld [vmem:[%s296 + $0xb0] sm:$0xff]
                  %321 = vst [vmem:[%s297 + $0x58] sm:$0xff] %v320
                  %v322 = vld [vmem:[%s296 + $0xc0] sm:$0xff]
                  %323 = vst [vmem:[%s297 + $0x60] sm:$0xff] %v322
                  %v324 = vld [vmem:[%s296 + $0xd0] sm:$0xff]
                  %325 = vst [vmem:[%s297 + $0x68] sm:$0xff] %v324
                  %v326 = vld [vmem:[%s296 + $0xe0] sm:$0xff]
                  %327 = vst [vmem:[%s297 + $0x70] sm:$0xff] %v326
                  %v328 = vld [vmem:[%s296 + $0xf0] sm:$0xff]
                  %329 = vst [vmem:[%s297 + $0x78] sm:$0xff] %v328
                $region56: #{sparse_autoencoder_forward.1} parent=50 // loop_footer
                  %s295 = sadd.s32 1, %s291
                $region57: #{sparse_autoencoder_forward.1} parent=50 // loop_footer_branch
                  %290 = sbr.rel target = $region53
                $region58: #{sparse_autoencoder_forward.1} parent=50 // loop_exit
                  _
              $region51: #{sparse_autoencoder_forward.1} parent=35 // pred_fallthru
                _
              // Predicated region
              $region59: #{sparse_autoencoder_forward.1} parent=35 // pred_check
                _
              $region60: #{sparse_autoencoder_forward.1} parent=35 // pred_check_branch
                %331 = sbr.rel target = $region62
              $region61: #{sparse_autoencoder_forward.1} parent=35 // pred_region
                _
              $region62: #{sparse_autoencoder_forward.1} parent=35 // pred_fallthru
                _
            $region36: #{sparse_autoencoder_forward.1} parent=31 // pred_fallthru
              _
            // Predicated region
            $region37: #{sparse_autoencoder_forward.1} parent=31 // pred_check
              _
            $region38: #{sparse_autoencoder_forward.1} parent=31 // pred_check_branch
              %246 = sbr.rel target = $region40
            $region39: #{sparse_autoencoder_forward.1} parent=31 // pred_region
              loop: start=0, step=1, limit=1
              $region41: #{sparse_autoencoder_forward.1} parent=39 // loop_pre_header
                _
              $region42: #{sparse_autoencoder_forward.1} parent=39 // loop_header
                %s249 = sphi 0, %s253
                %p250 = scmp.ge.s32.totalorder %s249, 1
                %s254 = sphi %s240, %s240
                %s255 = sphi %s235, %s235
              $region43: #{sparse_autoencoder_forward.1} parent=39 // loop_header_branch
                %252 = sbr.rel (%p250) target = $region47
              $region44: #{sparse_autoencoder_forward.1} parent=39 // loop_body
                %v256 = vld [vmem:[%s254] sm:$0xff]
                %257 = vst [vmem:[%s255] sm:$0xff] %v256
                %v258 = vld [vmem:[%s254 + $0x10] sm:$0xff]
                %259 = vst [vmem:[%s255 + $0x8] sm:$0xff] %v258
                %v260 = vld [vmem:[%s254 + $0x20] sm:$0xff]
                %261 = vst [vmem:[%s255 + $0x10] sm:$0xff] %v260
                %v262 = vld [vmem:[%s254 + $0x30] sm:$0xff]
                %263 = vst [vmem:[%s255 + $0x18] sm:$0xff] %v262
                %v264 = vld [vmem:[%s254 + $0x40] sm:$0xff]
                %265 = vst [vmem:[%s255 + $0x20] sm:$0xff] %v264
                %v266 = vld [vmem:[%s254 + $0x50] sm:$0xff]
                %267 = vst [vmem:[%s255 + $0x28] sm:$0xff] %v266
                %v268 = vld [vmem:[%s254 + $0x60] sm:$0xff]
                %269 = vst [vmem:[%s255 + $0x30] sm:$0xff] %v268
                %v270 = vld [vmem:[%s254 + $0x70] sm:$0xff]
                %271 = vst [vmem:[%s255 + $0x38] sm:$0xff] %v270
                %v272 = vld [vmem:[%s254 + $0x80] sm:$0xff]
                %273 = vst [vmem:[%s255 + $0x40] sm:$0xff] %v272
                %v274 = vld [vmem:[%s254 + $0x90] sm:$0xff]
                %275 = vst [vmem:[%s255 + $0x48] sm:$0xff] %v274
                %v276 = vld [vmem:[%s254 + $0xa0] sm:$0xff]
                %277 = vst [vmem:[%s255 + $0x50] sm:$0xff] %v276
                %v278 = vld [vmem:[%s254 + $0xb0] sm:$0xff]
                %279 = vst [vmem:[%s255 + $0x58] sm:$0xff] %v278
                %v280 = vld [vmem:[%s254 + $0xc0] sm:$0xff]
                %281 = vst [vmem:[%s255 + $0x60] sm:$0xff] %v280
                %v282 = vld [vmem:[%s254 + $0xd0] sm:$0xff]
                %283 = vst [vmem:[%s255 + $0x68] sm:$0xff] %v282
                %v284 = vld [vmem:[%s254 + $0xe0] sm:$0xff]
                %285 = vst [vmem:[%s255 + $0x70] sm:$0xff] %v284
                %v286 = vld [vmem:[%s254 + $0xf0] sm:$0xff]
                %287 = vst [vmem:[%s255 + $0x78] sm:$0xff] %v286
              $region45: #{sparse_autoencoder_forward.1} parent=39 // loop_footer
                %s253 = sadd.s32 1, %s249
              $region46: #{sparse_autoencoder_forward.1} parent=39 // loop_footer_branch
                %248 = sbr.rel target = $region42
              $region47: #{sparse_autoencoder_forward.1} parent=39 // loop_exit
                _
            $region40: #{sparse_autoencoder_forward.1} parent=31 // pred_fallthru
              _
          $region32: #{sparse_autoencoder_forward.1} parent=27 // pred_fallthru
            _
          %332 = vnop
        $region28: #{sparse_autoencoder_forward.1} parent=23 // pred_fallthru
          _
        // Predicated region
        $region63: #{sparse_autoencoder_forward.1} parent=23 // pred_check
          %p333 = pneg %p76
        $region64: #{sparse_autoencoder_forward.1} parent=23 // pred_check_branch
          %335 = sbr.rel (%p333) target = $region66
        $region65: #{sparse_autoencoder_forward.1} parent=23 // pred_region
          %s336 = smul.u32 16, %s24
          %p337 = scmp.lt.s32.totalorder %s336, 31
          %s338 = scalar_select %p337, %s336, 31
          %s339 = smul.addr %s338, 4
          %s340 = smul.addr %s339, 8
          %s341 = scalar_lea.vmem %s1, %s340
          %s342 = smul.u32 16, %s24
        $region66: #{sparse_autoencoder_forward.1} parent=23 // pred_fallthru
          _
        // Predicated region
        $region67: #{sparse_autoencoder_forward.1} parent=23 // pred_check
          %p343 = pneg %p123
        $region68: #{sparse_autoencoder_forward.1} parent=23 // pred_check_branch
          %345 = sbr.rel (%p343) target = $region70
        $region69: #{sparse_autoencoder_forward.1} parent=23 // pred_region
          %s346 = smul.u32 16, %s24
          %p347 = scmp.lt.s32.totalorder %s346, 31
          %s348 = scalar_select %p347, %s346, 31
          %s349 = smul.addr %s348, 8
          %s350 = scalar_lea.vmem %s3, %s349
          %s351 = smul.u32 16, %s24
        $region70: #{sparse_autoencoder_forward.1} parent=23 // pred_fallthru
          _
      $region24: #{sparse_autoencoder_forward.1} parent=5 // pred_fallthru
        _
      %p352 = scmp.le.s32.totalorder 1, %s16
      %p353 = scmp.lt.s32.totalorder %s16, 5
      %p354 = pnand %p352, %p353
      %p355 = pneg %p354
      // Predicated region
      $region71: #{sparse_autoencoder_forward.1} parent=5 // pred_check
        _
      $region72: #{sparse_autoencoder_forward.1} parent=5 // pred_check_branch
        %357 = sbr.rel (%p354) target = $region74
      $region73: #{sparse_autoencoder_forward.1} parent=5 // pred_region
        %s358 = ssub.s32 %s16, 1
        %s359 = sand.u32 %s43, 1
        %s360 = sand.u32 %s43, 1
        %s361 = smul.addr %s360, 128
        %s362 = scalar_lea.vmem [#allocation2], %s361
        // Predicated region
        $region75: #{sparse_autoencoder_forward.1} parent=73 // pred_check
          %p363 = pneg %p56
        $region76: #{sparse_autoencoder_forward.1} parent=73 // pred_check_branch
          %365 = sbr.rel (%p363) target = $region78
        $region77: #{sparse_autoencoder_forward.1} parent=73 // pred_region
          _
        $region78: #{sparse_autoencoder_forward.1} parent=73 // pred_fallthru
          _
        %s366 = sand.u32 %s43, 1
        %s367 = sand.u32 %s43, 1
        %s368 = smul.addr %s367, 128
        %s369 = scalar_lea.vmem [#allocation2], %s368
        %p370 = pneg %p56
        %p371 = pneg %p53
        %s372 = smul.u32 16, %s26
        %p373 = scmp.lt.s32.totalorder %s372, 31
        %s374 = scalar_select %p373, %s372, 31
        %s375 = smul.addr %s374, 4
        %s376 = smul.addr %s375, 8
        %s377 = scalar_lea.vmem %s1, %s376
        %p378 = pneg %p82
        %p379 = pneg %p79
        %p380 = pneg %p103
        %p381 = pneg %p100
        %s382 = smul.u32 16, %s26
        %p383 = scmp.lt.s32.totalorder %s382, 31
        %s384 = scalar_select %p383, %s382, 31
        %s385 = smul.addr %s384, 8
        %s386 = scalar_lea.vmem %s3, %s385
        %p387 = pneg %p129
        %p388 = pneg %p126
        %p389 = pneg %p150
        %p390 = pneg %p147
        %p391 = pneg %p176
        %p392 = pneg %p173
        %s393 = sand.u32 %s163, 1
        %s394 = scalar_lea.sflag [#allocation4], %s393
        %s395 = sand.u32 %s163, 1
        %s396 = smul.addr %s395, 8
        %s397 = scalar_lea.vmem [#allocation3], %s396
        %p398 = pneg %p204
        %p399 = pneg %p201
        %p400 = scmp.lt.s32.totalorder %s25, 1
        %s401 = scalar_select %p400, %s25, 1
        %p402 = scmp.lt.s32.totalorder %s26, 1
        %s403 = scalar_select %p402, %s26, 1
        %s404 = smul.addr %s401, 2
        %s405 = sadd.s32 %s403, %s404
        %s406 = smul.addr %s405, 8
        %s407 = scalar_lea.vmem %s6, %s406
        %s408 = smul.u32 16, %s26
        %s409 = smul.u32 16, %s26
        %p410 = scmp.lt.s32.totalorder %s409, 31
        %s411 = scalar_select %p410, %s409, 31
        %s412 = smul.addr %s411, 4
        %s413 = smul.addr %s412, 8
        %s414 = scalar_lea.vmem %s1, %s413
        %s415 = smul.u32 16, %s26
        %s416 = smul.u32 16, %s26
        %p417 = scmp.lt.s32.totalorder %s416, 31
        %s418 = scalar_select %p417, %s416, 31
        %s419 = smul.addr %s418, 8
        %s420 = scalar_lea.vmem %s3, %s419
        %s421 = smul.u32 16, %s26
        %p422 = scmp.lt.s32.totalorder %s25, 1
        %s423 = scalar_select %p422, %s25, 1
        %p424 = scmp.lt.s32.totalorder %s26, 1
        %s425 = scalar_select %p424, %s26, 1
        %s426 = smul.addr %s423, 2
        %s427 = sadd.s32 %s425, %s426
        %s428 = smul.addr %s427, 8
        %s429 = scalar_lea.vmem %s6, %s428
        %p430 = scmp.eq.s32.totalorder %s26, 0
        // Predicated region
        $region79: #{sparse_autoencoder_forward.1} parent=73 // pred_check
          %p431 = pneg %p430
        $region80: #{sparse_autoencoder_forward.1} parent=73 // pred_check_branch
          %433 = sbr.rel (%p431) target = $region82
        $region81: #{sparse_autoencoder_forward.1} parent=73 // pred_region
          %v434 = vld [vmem:[%s4] sm:$0x1]
          %v436 = vlaneseq
          %v437 = vshrl.u32 %v436, 7
          %v438 = vsub.s32 0, %v437
          %v439 = vrot.slane %v434, %v438
          %vm441 = vcmask 261120
          %442 = vst.msk [vmem:[%s397] sm:$0xff] %vm441, %v439
        $region82: #{sparse_autoencoder_forward.1} parent=73 // pred_fallthru
          _
        %v443 = vld [vmem:[%s2] sm:$0x1]
        %v445 = vlaneseq
        %v446 = vshrl.u32 %v445, 7
        %v447 = vsub.s32 0, %v446
        %v448 = vrot.slane %v443, %v447
        %v450 = vld [vmem:[%s362] sm:$0xff]
        %v451 = vld [vmem:[%s414] sm:$0xff]
        %v452 = vld [vmem:[%s414 + $0x8] sm:$0xff]
        %v453 = vld [vmem:[%s414 + $0x10] sm:$0xff]
        %v454 = vld [vmem:[%s414 + $0x18] sm:$0xff]
        %vm455 = vcmask 261120
        %v457 = vsel %vm455, %v450, 0
        %459 = vmatprep.subr.mxu0 0.0
        %460 = vmatpush1.msra.mxu0 %v451
        %461 = vmatprep.subr.mxu0 0.0
        %462 = vmatpush1.msra.mxu0 %v452
        %463 = vmatprep.subr.mxu0 0.0
        %464 = vmatpush1.msra.mxu0 %v453
        %465 = vmatprep.subr.mxu0 0.0
        %466 = vmatpush1.msra.mxu0 %v454
        %467 = vmatprep.subr.mxu0 0.0
        %468 = vmatpush1.msra.mxu0 0.0
        %469 = vmatprep.subr.mxu0 0.0
        %470 = vmatpush1.msra.mxu0 0.0
        %471 = vmatprep.subr.mxu0 0.0
        %472 = vmatpush1.msra.mxu0 0.0
        %473 = vmatprep.subr.mxu0 0.0
        %474 = vmatpush1.msra.mxu0 0.0
        %475 = vmatprep.subr.mxu0 0.0
        %476 = vmatpush1.msra.mxu0 0.0
        %477 = vmatprep.subr.mxu0 0.0
        %478 = vmatpush1.msra.mxu0 0.0
        %479 = vmatprep.subr.mxu0 0.0
        %480 = vmatpush1.msra.mxu0 0.0
        %481 = vmatprep.subr.mxu0 0.0
        %482 = vmatpush1.msra.mxu0 0.0
        %483 = vmatprep.subr.mxu0 0.0
        %484 = vmatpush1.msra.mxu0 0.0
        %485 = vmatprep.subr.mxu0 0.0
        %486 = vmatpush1.msra.mxu0 0.0
        %487 = vmatprep.subr.mxu0 0.0
        %488 = vmatpush1.msra.mxu0 0.0
        %489 = vmatprep.subr.mxu0 0.0
        %490 = vmatpush1.msra.mxu0 0.0
        %491 = vmatprep.subr.mxu0 0.0
        %492 = vmatpush1.msra.mxu0 0.0
        %493 = vmatprep.subr.mxu0 0.0
        %494 = vmatpush1.msra.mxu0 0.0
        %495 = vmatprep.subr.mxu0 0.0
        %496 = vmatpush1.msra.mxu0 0.0
        %497 = vmatprep.subr.mxu0 0.0
        %498 = vmatpush1.msra.mxu0 0.0
        %499 = vmatprep.subr.mxu0 0.0
        %500 = vmatpush1.msra.mxu0 0.0
        %501 = vmatprep.subr.mxu0 0.0
        %502 = vmatpush1.msra.mxu0 0.0
        %503 = vmatprep.subr.mxu0 0.0
        %504 = vmatpush1.msra.mxu0 0.0
        %505 = vmatprep.subr.mxu0 0.0
        %506 = vmatpush1.msra.mxu0 0.0
        %507 = vmatprep.subr.mxu0 0.0
        %508 = vmatpush1.msra.mxu0 0.0
        %509 = vmatprep.subr.mxu0 0.0
        %510 = vmatpush1.msra.mxu0 0.0
        %511 = vmatprep.subr.mxu0 0.0
        %512 = vmatpush1.msra.mxu0 0.0
        %513 = vmatprep.subr.mxu0 0.0
        %514 = vmatpush1.msra.mxu0 0.0
        %515 = vmatprep.subr.mxu0 0.0
        %516 = vmatpush1.msra.mxu0 0.0
        %517 = vmatprep.subr.mxu0 0.0
        %518 = vmatpush1.msra.mxu0 0.0
        %519 = vmatprep.subr.mxu0 0.0
        %520 = vmatpush1.msra.mxu0 0.0
        %521 = vmatprep.subr.mxu0 0.0
        %522 = vmatpush1.msra.mxu0 0.0
        %523 = vmatprep.mubr.f32.mxu0 0.0
        %524 = vmatmul.mubr.f32.gmra.mrb[0].mxu0 %v457
        %v525 = vpop.f32.mrb[0].mxu0
        %v526 = vadd.f32 %v448, %v525
        %v527 = vpop.f32.mrb[0].mxu0
        %528 = vdwg.mxu0
        %vm529 = vcmask 64512
        %530 = vst.msk [vmem:[%s429] sm:$0xff] %vm529, %v526
        %s531 = scalar_lea.vmem %s362, 8 [#allocation2]
        %v532 = vld [vmem:[%s531] sm:$0xff]
        %s533 = scalar_lea.vmem %s414, 32
        %v534 = vld [vmem:[%s533] sm:$0xff]
        %v535 = vld [vmem:[%s533 + $0x8] sm:$0xff]
        %v536 = vld [vmem:[%s533 + $0x10] sm:$0xff]
        %v537 = vld [vmem:[%s533 + $0x18] sm:$0xff]
        %v539 = vsel %vm455, %v532, 0
        %541 = vmatprep.subr.mxu0 0.0
        %542 = vmatpush1.msra.mxu0 %v534
        %543 = vmatprep.subr.mxu0 0.0
        %544 = vmatpush1.msra.mxu0 %v535
        %545 = vmatprep.subr.mxu0 0.0
        %546 = vmatpush1.msra.mxu0 %v536
        %547 = vmatprep.subr.mxu0 0.0
        %548 = vmatpush1.msra.mxu0 %v537
        %549 = vmatprep.subr.mxu0 0.0
        %550 = vmatpush1.msra.mxu0 0.0
        %551 = vmatprep.subr.mxu0 0.0
        %552 = vmatpush1.msra.mxu0 0.0
        %553 = vmatprep.subr.mxu0 0.0
        %554 = vmatpush1.msra.mxu0 0.0
        %555 = vmatprep.subr.mxu0 0.0
        %556 = vmatpush1.msra.mxu0 0.0
        %557 = vmatprep.subr.mxu0 0.0
        %558 = vmatpush1.msra.mxu0 0.0
        %559 = vmatprep.subr.mxu0 0.0
        %560 = vmatpush1.msra.mxu0 0.0
        %561 = vmatprep.subr.mxu0 0.0
        %562 = vmatpush1.msra.mxu0 0.0
        %563 = vmatprep.subr.mxu0 0.0
        %564 = vmatpush1.msra.mxu0 0.0
        %565 = vmatprep.subr.mxu0 0.0
        %566 = vmatpush1.msra.mxu0 0.0
        %567 = vmatprep.subr.mxu0 0.0
        %568 = vmatpush1.msra.mxu0 0.0
        %569 = vmatprep.subr.mxu0 0.0
        %570 = vmatpush1.msra.mxu0 0.0
        %571 = vmatprep.subr.mxu0 0.0
        %572 = vmatpush1.msra.mxu0 0.0
        %573 = vmatprep.subr.mxu0 0.0
        %574 = vmatpush1.msra.mxu0 0.0
        %575 = vmatprep.subr.mxu0 0.0
        %576 = vmatpush1.msra.mxu0 0.0
        %577 = vmatprep.subr.mxu0 0.0
        %578 = vmatpush1.msra.mxu0 0.0
        %579 = vmatprep.subr.mxu0 0.0
        %580 = vmatpush1.msra.mxu0 0.0
        %581 = vmatprep.subr.mxu0 0.0
        %582 = vmatpush1.msra.mxu0 0.0
        %583 = vmatprep.subr.mxu0 0.0
        %584 = vmatpush1.msra.mxu0 0.0
        %585 = vmatprep.subr.mxu0 0.0
        %586 = vmatpush1.msra.mxu0 0.0
        %587 = vmatprep.subr.mxu0 0.0
        %588 = vmatpush1.msra.mxu0 0.0
        %589 = vmatprep.subr.mxu0 0.0
        %590 = vmatpush1.msra.mxu0 0.0
        %591 = vmatprep.subr.mxu0 0.0
        %592 = vmatpush1.msra.mxu0 0.0
        %593 = vmatprep.subr.mxu0 0.0
        %594 = vmatpush1.msra.mxu0 0.0
        %595 = vmatprep.subr.mxu0 0.0
        %596 = vmatpush1.msra.mxu0 0.0
        %597 = vmatprep.subr.mxu0 0.0
        %598 = vmatpush1.msra.mxu0 0.0
        %599 = vmatprep.subr.mxu0 0.0
        %600 = vmatpush1.msra.mxu0 0.0
        %601 = vmatprep.subr.mxu0 0.0
        %602 = vmatpush1.msra.mxu0 0.0
        %603 = vmatprep.subr.mxu0 0.0
        %604 = vmatpush1.msra.mxu0 0.0
        %605 = vmatprep.mubr.f32.mxu0 0.0
        %606 = vmatmul.mubr.f32.gmra.mrb[0].mxu0 %v539
        %v607 = vpop.f32.mrb[0].mxu0
        %v608 = vadd.f32 %v448, %v607
        %v609 = vpop.f32.mrb[0].mxu0
        %610 = vdwg.mxu0
        %612 = vrot.lane.b32.xlu0 %v608, 8
        %v613 = vpop.permute.xlu0 %612
        %vm615 = vcmask 130112
        %616 = vst.msk [vmem:[%s429] sm:$0xff] %vm615, %v613
        %s617 = scalar_lea.vmem %s362, 16 [#allocation2]
        %v618 = vld [vmem:[%s617] sm:$0xff]
        %s619 = scalar_lea.vmem %s414, 64
        %v620 = vld [vmem:[%s619] sm:$0xff]
        %v621 = vld [vmem:[%s619 + $0x8] sm:$0xff]
        %v622 = vld [vmem:[%s619 + $0x10] sm:$0xff]
        %v623 = vld [vmem:[%s619 + $0x18] sm:$0xff]
        %v625 = vsel %vm455, %v618, 0
        %627 = vmatprep.subr.mxu0 0.0
        %628 = vmatpush1.msra.mxu0 %v620
        %629 = vmatprep.subr.mxu0 0.0
        %630 = vmatpush1.msra.mxu0 %v621
        %631 = vmatprep.subr.mxu0 0.0
        %632 = vmatpush1.msra.mxu0 %v622
        %633 = vmatprep.subr.mxu0 0.0
        %634 = vmatpush1.msra.mxu0 %v623
        %635 = vmatprep.subr.mxu0 0.0
        %636 = vmatpush1.msra.mxu0 0.0
        %637 = vmatprep.subr.mxu0 0.0
        %638 = vmatpush1.msra.mxu0 0.0
        %639 = vmatprep.subr.mxu0 0.0
        %640 = vmatpush1.msra.mxu0 0.0
        %641 = vmatprep.subr.mxu0 0.0
        %642 = vmatpush1.msra.mxu0 0.0
        %643 = vmatprep.subr.mxu0 0.0
        %644 = vmatpush1.msra.mxu0 0.0
        %645 = vmatprep.subr.mxu0 0.0
        %646 = vmatpush1.msra.mxu0 0.0
        %647 = vmatprep.subr.mxu0 0.0
        %648 = vmatpush1.msra.mxu0 0.0
        %649 = vmatprep.subr.mxu0 0.0
        %650 = vmatpush1.msra.mxu0 0.0
        %651 = vmatprep.subr.mxu0 0.0
        %652 = vmatpush1.msra.mxu0 0.0
        %653 = vmatprep.subr.mxu0 0.0
        %654 = vmatpush1.msra.mxu0 0.0
        %655 = vmatprep.subr.mxu0 0.0
        %656 = vmatpush1.msra.mxu0 0.0
        %657 = vmatprep.subr.mxu0 0.0
        %658 = vmatpush1.msra.mxu0 0.0
        %659 = vmatprep.subr.mxu0 0.0
        %660 = vmatpush1.msra.mxu0 0.0
        %661 = vmatprep.subr.mxu0 0.0
        %662 = vmatpush1.msra.mxu0 0.0
        %663 = vmatprep.subr.mxu0 0.0
        %664 = vmatpush1.msra.mxu0 0.0
        %665 = vmatprep.subr.mxu0 0.0
        %666 = vmatpush1.msra.mxu0 0.0
        %667 = vmatprep.subr.mxu0 0.0
        %668 = vmatpush1.msra.mxu0 0.0
        %669 = vmatprep.subr.mxu0 0.0
        %670 = vmatpush1.msra.mxu0 0.0
        %671 = vmatprep.subr.mxu0 0.0
        %672 = vmatpush1.msra.mxu0 0.0
        %673 = vmatprep.subr.mxu0 0.0
        %674 = vmatpush1.msra.mxu0 0.0
        %675 = vmatprep.subr.mxu0 0.0
        %676 = vmatpush1.msra.mxu0 0.0
        %677 = vmatprep.subr.mxu0 0.0
        %678 = vmatpush1.msra.mxu0 0.0
        %679 = vmatprep.subr.mxu0 0.0
        %680 = vmatpush1.msra.mxu0 0.0
        %681 = vmatprep.subr.mxu0 0.0
        %682 = vmatpush1.msra.mxu0 0.0
        %683 = vmatprep.subr.mxu0 0.0
        %684 = vmatpush1.msra.mxu0 0.0
        %685 = vmatprep.subr.mxu0 0.0
        %686 = vmatpush1.msra.mxu0 0.0
        %687 = vmatprep.subr.mxu0 0.0
        %688 = vmatpush1.msra.mxu0 0.0
        %689 = vmatprep.subr.mxu0 0.0
        %690 = vmatpush1.msra.mxu0 0.0
        %691 = vmatprep.mubr.f32.mxu0 0.0
        %692 = vmatmul.mubr.f32.gmra.mrb[0].mxu0 %v625
        %v693 = vpop.f32.mrb[0].mxu0
        %v694 = vadd.f32 %v448, %v693
        %v695 = vpop.f32.mrb[0].mxu0
        %696 = vdwg.mxu0
        %698 = vrot.lane.b32.xlu0 %v694, 16
        %v699 = vpop.permute.xlu0 %698
        %vm701 = vcmask 195712
        %702 = vst.msk [vmem:[%s429] sm:$0xff] %vm701, %v699
        %s703 = scalar_lea.vmem %s362, 24 [#allocation2]
        %v704 = vld [vmem:[%s703] sm:$0xff]
        %s705 = scalar_lea.vmem %s414, 96
        %v706 = vld [vmem:[%s705] sm:$0xff]
        %v707 = vld [vmem:[%s705 + $0x8] sm:$0xff]
        %v708 = vld [vmem:[%s705 + $0x10] sm:$0xff]
        %v709 = vld [vmem:[%s705 + $0x18] sm:$0xff]
        %v711 = vsel %vm455, %v704, 0
        %713 = vmatprep.subr.mxu0 0.0
        %714 = vmatpush1.msra.mxu0 %v706
        %715 = vmatprep.subr.mxu0 0.0
        %716 = vmatpush1.msra.mxu0 %v707
        %717 = vmatprep.subr.mxu0 0.0
        %718 = vmatpush1.msra.mxu0 %v708
        %719 = vmatprep.subr.mxu0 0.0
        %720 = vmatpush1.msra.mxu0 %v709
        %721 = vmatprep.subr.mxu0 0.0
        %722 = vmatpush1.msra.mxu0 0.0
        %723 = vmatprep.subr.mxu0 0.0
        %724 = vmatpush1.msra.mxu0 0.0
        %725 = vmatprep.subr.mxu0 0.0
        %726 = vmatpush1.msra.mxu0 0.0
        %727 = vmatprep.subr.mxu0 0.0
        %728 = vmatpush1.msra.mxu0 0.0
        %729 = vmatprep.subr.mxu0 0.0
        %730 = vmatpush1.msra.mxu0 0.0
        %731 = vmatprep.subr.mxu0 0.0
        %732 = vmatpush1.msra.mxu0 0.0
        %733 = vmatprep.subr.mxu0 0.0
        %734 = vmatpush1.msra.mxu0 0.0
        %735 = vmatprep.subr.mxu0 0.0
        %736 = vmatpush1.msra.mxu0 0.0
        %737 = vmatprep.subr.mxu0 0.0
        %738 = vmatpush1.msra.mxu0 0.0
        %739 = vmatprep.subr.mxu0 0.0
        %740 = vmatpush1.msra.mxu0 0.0
        %741 = vmatprep.subr.mxu0 0.0
        %742 = vmatpush1.msra.mxu0 0.0
        %743 = vmatprep.subr.mxu0 0.0
        %744 = vmatpush1.msra.mxu0 0.0
        %745 = vmatprep.subr.mxu0 0.0
        %746 = vmatpush1.msra.mxu0 0.0
        %747 = vmatprep.subr.mxu0 0.0
        %748 = vmatpush1.msra.mxu0 0.0
        %749 = vmatprep.subr.mxu0 0.0
        %750 = vmatpush1.msra.mxu0 0.0
        %751 = vmatprep.subr.mxu0 0.0
        %752 = vmatpush1.msra.mxu0 0.0
        %753 = vmatprep.subr.mxu0 0.0
        %754 = vmatpush1.msra.mxu0 0.0
        %755 = vmatprep.subr.mxu0 0.0
        %756 = vmatpush1.msra.mxu0 0.0
        %757 = vmatprep.subr.mxu0 0.0
        %758 = vmatpush1.msra.mxu0 0.0
        %759 = vmatprep.subr.mxu0 0.0
        %760 = vmatpush1.msra.mxu0 0.0
        %761 = vmatprep.subr.mxu0 0.0
        %762 = vmatpush1.msra.mxu0 0.0
        %763 = vmatprep.subr.mxu0 0.0
        %764 = vmatpush1.msra.mxu0 0.0
        %765 = vmatprep.subr.mxu0 0.0
        %766 = vmatpush1.msra.mxu0 0.0
        %767 = vmatprep.subr.mxu0 0.0
        %768 = vmatpush1.msra.mxu0 0.0
        %769 = vmatprep.subr.mxu0 0.0
        %770 = vmatpush1.msra.mxu0 0.0
        %771 = vmatprep.subr.mxu0 0.0
        %772 = vmatpush1.msra.mxu0 0.0
        %773 = vmatprep.subr.mxu0 0.0
        %774 = vmatpush1.msra.mxu0 0.0
        %775 = vmatprep.subr.mxu0 0.0
        %776 = vmatpush1.msra.mxu0 0.0
        %777 = vmatprep.mubr.f32.mxu0 0.0
        %778 = vmatmul.mubr.f32.gmra.mrb[0].mxu0 %v711
        %v779 = vpop.f32.mrb[0].mxu0
        %v780 = vadd.f32 %v448, %v779
        %v781 = vpop.f32.mrb[0].mxu0
        %782 = vdwg.mxu0
        %784 = vrot.lane.b32.xlu0 %v780, 24
        %v785 = vpop.permute.xlu0 %784
        %vm787 = vcmask 261312
        %788 = vst.msk [vmem:[%s429] sm:$0xff] %vm787, %v785
        %s789 = scalar_lea.vmem %s362, 32 [#allocation2]
        %v790 = vld [vmem:[%s789] sm:$0xff]
        %s791 = scalar_lea.vmem %s414, 128
        %v792 = vld [vmem:[%s791] sm:$0xff]
        %v793 = vld [vmem:[%s791 + $0x8] sm:$0xff]
        %v794 = vld [vmem:[%s791 + $0x10] sm:$0xff]
        %v795 = vld [vmem:[%s791 + $0x18] sm:$0xff]
        %v797 = vsel %vm455, %v790, 0
        %799 = vmatprep.subr.mxu0 0.0
        %800 = vmatpush1.msra.mxu0 %v792
        %801 = vmatprep.subr.mxu0 0.0
        %802 = vmatpush1.msra.mxu0 %v793
        %803 = vmatprep.subr.mxu0 0.0
        %804 = vmatpush1.msra.mxu0 %v794
        %805 = vmatprep.subr.mxu0 0.0
        %806 = vmatpush1.msra.mxu0 %v795
        %807 = vmatprep.subr.mxu0 0.0
        %808 = vmatpush1.msra.mxu0 0.0
        %809 = vmatprep.subr.mxu0 0.0
        %810 = vmatpush1.msra.mxu0 0.0
        %811 = vmatprep.subr.mxu0 0.0
        %812 = vmatpush1.msra.mxu0 0.0
        %813 = vmatprep.subr.mxu0 0.0
        %814 = vmatpush1.msra.mxu0 0.0
        %815 = vmatprep.subr.mxu0 0.0
        %816 = vmatpush1.msra.mxu0 0.0
        %817 = vmatprep.subr.mxu0 0.0
        %818 = vmatpush1.msra.mxu0 0.0
        %819 = vmatprep.subr.mxu0 0.0
        %820 = vmatpush1.msra.mxu0 0.0
        %821 = vmatprep.subr.mxu0 0.0
        %822 = vmatpush1.msra.mxu0 0.0
        %823 = vmatprep.subr.mxu0 0.0
        %824 = vmatpush1.msra.mxu0 0.0
        %825 = vmatprep.subr.mxu0 0.0
        %826 = vmatpush1.msra.mxu0 0.0
        %827 = vmatprep.subr.mxu0 0.0
        %828 = vmatpush1.msra.mxu0 0.0
        %829 = vmatprep.subr.mxu0 0.0
        %830 = vmatpush1.msra.mxu0 0.0
        %831 = vmatprep.subr.mxu0 0.0
        %832 = vmatpush1.msra.mxu0 0.0
        %833 = vmatprep.subr.mxu0 0.0
        %834 = vmatpush1.msra.mxu0 0.0
        %835 = vmatprep.subr.mxu0 0.0
        %836 = vmatpush1.msra.mxu0 0.0
        %837 = vmatprep.subr.mxu0 0.0
        %838 = vmatpush1.msra.mxu0 0.0
        %839 = vmatprep.subr.mxu0 0.0
        %840 = vmatpush1.msra.mxu0 0.0
        %841 = vmatprep.subr.mxu0 0.0
        %842 = vmatpush1.msra.mxu0 0.0
        %843 = vmatprep.subr.mxu0 0.0
        %844 = vmatpush1.msra.mxu0 0.0
        %845 = vmatprep.subr.mxu0 0.0
        %846 = vmatpush1.msra.mxu0 0.0
        %847 = vmatprep.subr.mxu0 0.0
        %848 = vmatpush1.msra.mxu0 0.0
        %849 = vmatprep.subr.mxu0 0.0
        %850 = vmatpush1.msra.mxu0 0.0
        %851 = vmatprep.subr.mxu0 0.0
        %852 = vmatpush1.msra.mxu0 0.0
        %853 = vmatprep.subr.mxu0 0.0
        %854 = vmatpush1.msra.mxu0 0.0
        %855 = vmatprep.subr.mxu0 0.0
        %856 = vmatpush1.msra.mxu0 0.0
        %857 = vmatprep.subr.mxu0 0.0
        %858 = vmatpush1.msra.mxu0 0.0
        %859 = vmatprep.subr.mxu0 0.0
        %860 = vmatpush1.msra.mxu0 0.0
        %861 = vmatprep.subr.mxu0 0.0
        %862 = vmatpush1.msra.mxu0 0.0
        %863 = vmatprep.mubr.f32.mxu0 0.0
        %864 = vmatmul.mubr.f32.gmra.mrb[0].mxu0 %v797
        %v865 = vpop.f32.mrb[0].mxu0
        %v866 = vadd.f32 %v448, %v865
        %v867 = vpop.f32.mrb[0].mxu0
        %868 = vdwg.mxu0
        %870 = vrot.lane.b32.xlu0 %v866, 32
        %v871 = vpop.permute.xlu0 %870
        %vm873 = vcmask 326912
        %874 = vst.msk [vmem:[%s429] sm:$0xff] %vm873, %v871
        %s875 = scalar_lea.vmem %s362, 40 [#allocation2]
        %v876 = vld [vmem:[%s875] sm:$0xff]
        %s877 = scalar_lea.vmem %s414, 160
        %v878 = vld [vmem:[%s877] sm:$0xff]
        %v879 = vld [vmem:[%s877 + $0x8] sm:$0xff]
        %v880 = vld [vmem:[%s877 + $0x10] sm:$0xff]
        %v881 = vld [vmem:[%s877 + $0x18] sm:$0xff]
        %v883 = vsel %vm455, %v876, 0
        %885 = vmatprep.subr.mxu0 0.0
        %886 = vmatpush1.msra.mxu0 %v878
        %887 = vmatprep.subr.mxu0 0.0
        %888 = vmatpush1.msra.mxu0 %v879
        %889 = vmatprep.subr.mxu0 0.0
        %890 = vmatpush1.msra.mxu0 %v880
        %891 = vmatprep.subr.mxu0 0.0
        %892 = vmatpush1.msra.mxu0 %v881
        %893 = vmatprep.subr.mxu0 0.0
        %894 = vmatpush1.msra.mxu0 0.0
        %895 = vmatprep.subr.mxu0 0.0
        %896 = vmatpush1.msra.mxu0 0.0
        %897 = vmatprep.subr.mxu0 0.0
        %898 = vmatpush1.msra.mxu0 0.0
        %899 = vmatprep.subr.mxu0 0.0
        %900 = vmatpush1.msra.mxu0 0.0
        %901 = vmatprep.subr.mxu0 0.0
        %902 = vmatpush1.msra.mxu0 0.0
        %903 = vmatprep.subr.mxu0 0.0
        %904 = vmatpush1.msra.mxu0 0.0
        %905 = vmatprep.subr.mxu0 0.0
        %906 = vmatpush1.msra.mxu0 0.0
        %907 = vmatprep.subr.mxu0 0.0
        %908 = vmatpush1.msra.mxu0 0.0
        %909 = vmatprep.subr.mxu0 0.0
        %910 = vmatpush1.msra.mxu0 0.0
        %911 = vmatprep.subr.mxu0 0.0
        %912 = vmatpush1.msra.mxu0 0.0
        %913 = vmatprep.subr.mxu0 0.0
        %914 = vmatpush1.msra.mxu0 0.0
        %915 = vmatprep.subr.mxu0 0.0
        %916 = vmatpush1.msra.mxu0 0.0
        %917 = vmatprep.subr.mxu0 0.0
        %918 = vmatpush1.msra.mxu0 0.0
        %919 = vmatprep.subr.mxu0 0.0
        %920 = vmatpush1.msra.mxu0 0.0
        %921 = vmatprep.subr.mxu0 0.0
        %922 = vmatpush1.msra.mxu0 0.0
        %923 = vmatprep.subr.mxu0 0.0
        %924 = vmatpush1.msra.mxu0 0.0
        %925 = vmatprep.subr.mxu0 0.0
        %926 = vmatpush1.msra.mxu0 0.0
        %927 = vmatprep.subr.mxu0 0.0
        %928 = vmatpush1.msra.mxu0 0.0
        %929 = vmatprep.subr.mxu0 0.0
        %930 = vmatpush1.msra.mxu0 0.0
        %931 = vmatprep.subr.mxu0 0.0
        %932 = vmatpush1.msra.mxu0 0.0
        %933 = vmatprep.subr.mxu0 0.0
        %934 = vmatpush1.msra.mxu0 0.0
        %935 = vmatprep.subr.mxu0 0.0
        %936 = vmatpush1.msra.mxu0 0.0
        %937 = vmatprep.subr.mxu0 0.0
        %938 = vmatpush1.msra.mxu0 0.0
        %939 = vmatprep.subr.mxu0 0.0
        %940 = vmatpush1.msra.mxu0 0.0
        %941 = vmatprep.subr.mxu0 0.0
        %942 = vmatpush1.msra.mxu0 0.0
        %943 = vmatprep.subr.mxu0 0.0
        %944 = vmatpush1.msra.mxu0 0.0
        %945 = vmatprep.subr.mxu0 0.0
        %946 = vmatpush1.msra.mxu0 0.0
        %947 = vmatprep.subr.mxu0 0.0
        %948 = vmatpush1.msra.mxu0 0.0
        %949 = vmatprep.mubr.f32.mxu0 0.0
        %950 = vmatmul.mubr.f32.gmra.mrb[0].mxu0 %v883
        %v951 = vpop.f32.mrb[0].mxu0
        %v952 = vadd.f32 %v448, %v951
        %v953 = vpop.f32.mrb[0].mxu0
        %954 = vdwg.mxu0
        %956 = vrot.lane.b32.xlu0 %v952, 40
        %v957 = vpop.permute.xlu0 %956
        %vm959 = vcmask 392512
        %960 = vst.msk [vmem:[%s429] sm:$0xff] %vm959, %v957
        %s961 = scalar_lea.vmem %s362, 48 [#allocation2]
        %v962 = vld [vmem:[%s961] sm:$0xff]
        %s963 = scalar_lea.vmem %s414, 192
        %v964 = vld [vmem:[%s963] sm:$0xff]
        %v965 = vld [vmem:[%s963 + $0x8] sm:$0xff]
        %v966 = vld [vmem:[%s963 + $0x10] sm:$0xff]
        %v967 = vld [vmem:[%s963 + $0x18] sm:$0xff]
        %v969 = vsel %vm455, %v962, 0
        %971 = vmatprep.subr.mxu0 0.0
        %972 = vmatpush1.msra.mxu0 %v964
        %973 = vmatprep.subr.mxu0 0.0
        %974 = vmatpush1.msra.mxu0 %v965
        %975 = vmatprep.subr.mxu0 0.0
        %976 = vmatpush1.msra.mxu0 %v966
        %977 = vmatprep.subr.mxu0 0.0
        %978 = vmatpush1.msra.mxu0 %v967
        %979 = vmatprep.subr.mxu0 0.0
        %980 = vmatpush1.msra.mxu0 0.0
        %981 = vmatprep.subr.mxu0 0.0
        %982 = vmatpush1.msra.mxu0 0.0
        %983 = vmatprep.subr.mxu0 0.0
        %984 = vmatpush1.msra.mxu0 0.0
        %985 = vmatprep.subr.mxu0 0.0
        %986 = vmatpush1.msra.mxu0 0.0
        %987 = vmatprep.subr.mxu0 0.0
        %988 = vmatpush1.msra.mxu0 0.0
        %989 = vmatprep.subr.mxu0 0.0
        %990 = vmatpush1.msra.mxu0 0.0
        %991 = vmatprep.subr.mxu0 0.0
        %992 = vmatpush1.msra.mxu0 0.0
        %993 = vmatprep.subr.mxu0 0.0
        %994 = vmatpush1.msra.mxu0 0.0
        %995 = vmatprep.subr.mxu0 0.0
        %996 = vmatpush1.msra.mxu0 0.0
        %997 = vmatprep.subr.mxu0 0.0
        %998 = vmatpush1.msra.mxu0 0.0
        %999 = vmatprep.subr.mxu0 0.0
        %1000 = vmatpush1.msra.mxu0 0.0
        %1001 = vmatprep.subr.mxu0 0.0
        %1002 = vmatpush1.msra.mxu0 0.0
        %1003 = vmatprep.subr.mxu0 0.0
        %1004 = vmatpush1.msra.mxu0 0.0
        %1005 = vmatprep.subr.mxu0 0.0
        %1006 = vmatpush1.msra.mxu0 0.0
        %1007 = vmatprep.subr.mxu0 0.0
        %1008 = vmatpush1.msra.mxu0 0.0
        %1009 = vmatprep.subr.mxu0 0.0
        %1010 = vmatpush1.msra.mxu0 0.0
        %1011 = vmatprep.subr.mxu0 0.0
        %1012 = vmatpush1.msra.mxu0 0.0
        %1013 = vmatprep.subr.mxu0 0.0
        %1014 = vmatpush1.msra.mxu0 0.0
        %1015 = vmatprep.subr.mxu0 0.0
        %1016 = vmatpush1.msra.mxu0 0.0
        %1017 = vmatprep.subr.mxu0 0.0
        %1018 = vmatpush1.msra.mxu0 0.0
        %1019 = vmatprep.subr.mxu0 0.0
        %1020 = vmatpush1.msra.mxu0 0.0
        %1021 = vmatprep.subr.mxu0 0.0
        %1022 = vmatpush1.msra.mxu0 0.0
        %1023 = vmatprep.subr.mxu0 0.0
        %1024 = vmatpush1.msra.mxu0 0.0
        %1025 = vmatprep.subr.mxu0 0.0
        %1026 = vmatpush1.msra.mxu0 0.0
        %1027 = vmatprep.subr.mxu0 0.0
        %1028 = vmatpush1.msra.mxu0 0.0
        %1029 = vmatprep.subr.mxu0 0.0
        %1030 = vmatpush1.msra.mxu0 0.0
        %1031 = vmatprep.subr.mxu0 0.0
        %1032 = vmatpush1.msra.mxu0 0.0
        %1033 = vmatprep.subr.mxu0 0.0
        %1034 = vmatpush1.msra.mxu0 0.0
        %1035 = vmatprep.mubr.f32.mxu0 0.0
        %1036 = vmatmul.mubr.f32.gmra.mrb[0].mxu0 %v969
        %v1037 = vpop.f32.mrb[0].mxu0
        %v1038 = vadd.f32 %v448, %v1037
        %v1039 = vpop.f32.mrb[0].mxu0
        %1040 = vdwg.mxu0
        %1042 = vrot.lane.b32.xlu0 %v1038, 48
        %v1043 = vpop.permute.xlu0 %1042
        %vm1045 = vcmask 458112
        %1046 = vst.msk [vmem:[%s429] sm:$0xff] %vm1045, %v1043
        %s1047 = scalar_lea.vmem %s362, 56 [#allocation2]
        %v1048 = vld [vmem:[%s1047] sm:$0xff]
        %s1049 = scalar_lea.vmem %s414, 224
        %v1050 = vld [vmem:[%s1049] sm:$0xff]
        %v1051 = vld [vmem:[%s1049 + $0x8] sm:$0xff]
        %v1052 = vld [vmem:[%s1049 + $0x10] sm:$0xff]
        %v1053 = vld [vmem:[%s1049 + $0x18] sm:$0xff]
        %v1055 = vsel %vm455, %v1048, 0
        %1057 = vmatprep.subr.mxu0 0.0
        %1058 = vmatpush1.msra.mxu0 %v1050
        %1059 = vmatprep.subr.mxu0 0.0
        %1060 = vmatpush1.msra.mxu0 %v1051
        %1061 = vmatprep.subr.mxu0 0.0
        %1062 = vmatpush1.msra.mxu0 %v1052
        %1063 = vmatprep.subr.mxu0 0.0
        %1064 = vmatpush1.msra.mxu0 %v1053
        %1065 = vmatprep.subr.mxu0 0.0
        %1066 = vmatpush1.msra.mxu0 0.0
        %1067 = vmatprep.subr.mxu0 0.0
        %1068 = vmatpush1.msra.mxu0 0.0
        %1069 = vmatprep.subr.mxu0 0.0
        %1070 = vmatpush1.msra.mxu0 0.0
        %1071 = vmatprep.subr.mxu0 0.0
        %1072 = vmatpush1.msra.mxu0 0.0
        %1073 = vmatprep.subr.mxu0 0.0
        %1074 = vmatpush1.msra.mxu0 0.0
        %1075 = vmatprep.subr.mxu0 0.0
        %1076 = vmatpush1.msra.mxu0 0.0
        %1077 = vmatprep.subr.mxu0 0.0
        %1078 = vmatpush1.msra.mxu0 0.0
        %1079 = vmatprep.subr.mxu0 0.0
        %1080 = vmatpush1.msra.mxu0 0.0
        %1081 = vmatprep.subr.mxu0 0.0
        %1082 = vmatpush1.msra.mxu0 0.0
        %1083 = vmatprep.subr.mxu0 0.0
        %1084 = vmatpush1.msra.mxu0 0.0
        %1085 = vmatprep.subr.mxu0 0.0
        %1086 = vmatpush1.msra.mxu0 0.0
        %1087 = vmatprep.subr.mxu0 0.0
        %1088 = vmatpush1.msra.mxu0 0.0
        %1089 = vmatprep.subr.mxu0 0.0
        %1090 = vmatpush1.msra.mxu0 0.0
        %1091 = vmatprep.subr.mxu0 0.0
        %1092 = vmatpush1.msra.mxu0 0.0
        %1093 = vmatprep.subr.mxu0 0.0
        %1094 = vmatpush1.msra.mxu0 0.0
        %1095 = vmatprep.subr.mxu0 0.0
        %1096 = vmatpush1.msra.mxu0 0.0
        %1097 = vmatprep.subr.mxu0 0.0
        %1098 = vmatpush1.msra.mxu0 0.0
        %1099 = vmatprep.subr.mxu0 0.0
        %1100 = vmatpush1.msra.mxu0 0.0
        %1101 = vmatprep.subr.mxu0 0.0
        %1102 = vmatpush1.msra.mxu0 0.0
        %1103 = vmatprep.subr.mxu0 0.0
        %1104 = vmatpush1.msra.mxu0 0.0
        %1105 = vmatprep.subr.mxu0 0.0
        %1106 = vmatpush1.msra.mxu0 0.0
        %1107 = vmatprep.subr.mxu0 0.0
        %1108 = vmatpush1.msra.mxu0 0.0
        %1109 = vmatprep.subr.mxu0 0.0
        %1110 = vmatpush1.msra.mxu0 0.0
        %1111 = vmatprep.subr.mxu0 0.0
        %1112 = vmatpush1.msra.mxu0 0.0
        %1113 = vmatprep.subr.mxu0 0.0
        %1114 = vmatpush1.msra.mxu0 0.0
        %1115 = vmatprep.subr.mxu0 0.0
        %1116 = vmatpush1.msra.mxu0 0.0
        %1117 = vmatprep.subr.mxu0 0.0
        %1118 = vmatpush1.msra.mxu0 0.0
        %1119 = vmatprep.subr.mxu0 0.0
        %1120 = vmatpush1.msra.mxu0 0.0
        %1121 = vmatprep.mubr.f32.mxu0 0.0
        %1122 = vmatmul.mubr.f32.gmra.mrb[0].mxu0 %v1055
        %v1123 = vpop.f32.mrb[0].mxu0
        %v1124 = vadd.f32 %v448, %v1123
        %v1125 = vpop.f32.mrb[0].mxu0
        %1126 = vdwg.mxu0
        %1128 = vrot.lane.b32.xlu0 %v1124, 56
        %v1129 = vpop.permute.xlu0 %1128
        %vm1131 = vcmask 523712
        %1132 = vst.msk [vmem:[%s429] sm:$0xff] %vm1131, %v1129
        %s1133 = scalar_lea.vmem %s362, 64 [#allocation2]
        %v1134 = vld [vmem:[%s1133] sm:$0xff]
        %s1135 = scalar_lea.vmem %s414, 256
        %v1136 = vld [vmem:[%s1135] sm:$0xff]
        %v1137 = vld [vmem:[%s1135 + $0x8] sm:$0xff]
        %v1138 = vld [vmem:[%s1135 + $0x10] sm:$0xff]
        %v1139 = vld [vmem:[%s1135 + $0x18] sm:$0xff]
        %v1141 = vsel %vm455, %v1134, 0
        %1143 = vmatprep.subr.mxu0 0.0
        %1144 = vmatpush1.msra.mxu0 %v1136
        %1145 = vmatprep.subr.mxu0 0.0
        %1146 = vmatpush1.msra.mxu0 %v1137
        %1147 = vmatprep.subr.mxu0 0.0
        %1148 = vmatpush1.msra.mxu0 %v1138
        %1149 = vmatprep.subr.mxu0 0.0
        %1150 = vmatpush1.msra.mxu0 %v1139
        %1151 = vmatprep.subr.mxu0 0.0
        %1152 = vmatpush1.msra.mxu0 0.0
        %1153 = vmatprep.subr.mxu0 0.0
        %1154 = vmatpush1.msra.mxu0 0.0
        %1155 = vmatprep.subr.mxu0 0.0
        %1156 = vmatpush1.msra.mxu0 0.0
        %1157 = vmatprep.subr.mxu0 0.0
        %1158 = vmatpush1.msra.mxu0 0.0
        %1159 = vmatprep.subr.mxu0 0.0
        %1160 = vmatpush1.msra.mxu0 0.0
        %1161 = vmatprep.subr.mxu0 0.0
        %1162 = vmatpush1.msra.mxu0 0.0
        %1163 = vmatprep.subr.mxu0 0.0
        %1164 = vmatpush1.msra.mxu0 0.0
        %1165 = vmatprep.subr.mxu0 0.0
        %1166 = vmatpush1.msra.mxu0 0.0
        %1167 = vmatprep.subr.mxu0 0.0
        %1168 = vmatpush1.msra.mxu0 0.0
        %1169 = vmatprep.subr.mxu0 0.0
        %1170 = vmatpush1.msra.mxu0 0.0
        %1171 = vmatprep.subr.mxu0 0.0
        %1172 = vmatpush1.msra.mxu0 0.0
        %1173 = vmatprep.subr.mxu0 0.0
        %1174 = vmatpush1.msra.mxu0 0.0
        %1175 = vmatprep.subr.mxu0 0.0
        %1176 = vmatpush1.msra.mxu0 0.0
        %1177 = vmatprep.subr.mxu0 0.0
        %1178 = vmatpush1.msra.mxu0 0.0
        %1179 = vmatprep.subr.mxu0 0.0
        %1180 = vmatpush1.msra.mxu0 0.0
        %1181 = vmatprep.subr.mxu0 0.0
        %1182 = vmatpush1.msra.mxu0 0.0
        %1183 = vmatprep.subr.mxu0 0.0
        %1184 = vmatpush1.msra.mxu0 0.0
        %1185 = vmatprep.subr.mxu0 0.0
        %1186 = vmatpush1.msra.mxu0 0.0
        %1187 = vmatprep.subr.mxu0 0.0
        %1188 = vmatpush1.msra.mxu0 0.0
        %1189 = vmatprep.subr.mxu0 0.0
        %1190 = vmatpush1.msra.mxu0 0.0
        %1191 = vmatprep.subr.mxu0 0.0
        %1192 = vmatpush1.msra.mxu0 0.0
        %1193 = vmatprep.subr.mxu0 0.0
        %1194 = vmatpush1.msra.mxu0 0.0
        %1195 = vmatprep.subr.mxu0 0.0
        %1196 = vmatpush1.msra.mxu0 0.0
        %1197 = vmatprep.subr.mxu0 0.0
        %1198 = vmatpush1.msra.mxu0 0.0
        %1199 = vmatprep.subr.mxu0 0.0
        %1200 = vmatpush1.msra.mxu0 0.0
        %1201 = vmatprep.subr.mxu0 0.0
        %1202 = vmatpush1.msra.mxu0 0.0
        %1203 = vmatprep.subr.mxu0 0.0
        %1204 = vmatpush1.msra.mxu0 0.0
        %1205 = vmatprep.subr.mxu0 0.0
        %1206 = vmatpush1.msra.mxu0 0.0
        %1207 = vmatprep.mubr.f32.mxu0 0.0
        %1208 = vmatmul.mubr.f32.gmra.mrb[0].mxu0 %v1141
        %v1209 = vpop.f32.mrb[0].mxu0
        %v1210 = vadd.f32 %v448, %v1209
        %v1211 = vpop.f32.mrb[0].mxu0
        %1212 = vdwg.mxu0
        %1214 = vrot.lane.b32.xlu0 %v1210, 64
        %v1215 = vpop.permute.xlu0 %1214
        %vm1217 = vcmask 589312
        %1218 = vst.msk [vmem:[%s429] sm:$0xff] %vm1217, %v1215
        %s1219 = scalar_lea.vmem %s362, 72 [#allocation2]
        %v1220 = vld [vmem:[%s1219] sm:$0xff]
        %s1221 = scalar_lea.vmem %s414, 288
        %v1222 = vld [vmem:[%s1221] sm:$0xff]
        %v1223 = vld [vmem:[%s1221 + $0x8] sm:$0xff]
        %v1224 = vld [vmem:[%s1221 + $0x10] sm:$0xff]
        %v1225 = vld [vmem:[%s1221 + $0x18] sm:$0xff]
        %v1227 = vsel %vm455, %v1220, 0
        %1229 = vmatprep.subr.mxu0 0.0
        %1230 = vmatpush1.msra.mxu0 %v1222
        %1231 = vmatprep.subr.mxu0 0.0
        %1232 = vmatpush1.msra.mxu0 %v1223
        %1233 = vmatprep.subr.mxu0 0.0
        %1234 = vmatpush1.msra.mxu0 %v1224
        %1235 = vmatprep.subr.mxu0 0.0
        %1236 = vmatpush1.msra.mxu0 %v1225
        %1237 = vmatprep.subr.mxu0 0.0
        %1238 = vmatpush1.msra.mxu0 0.0
        %1239 = vmatprep.subr.mxu0 0.0
        %1240 = vmatpush1.msra.mxu0 0.0
        %1241 = vmatprep.subr.mxu0 0.0
        %1242 = vmatpush1.msra.mxu0 0.0
        %1243 = vmatprep.subr.mxu0 0.0
        %1244 = vmatpush1.msra.mxu0 0.0
        %1245 = vmatprep.subr.mxu0 0.0
        %1246 = vmatpush1.msra.mxu0 0.0
        %1247 = vmatprep.subr.mxu0 0.0
        %1248 = vmatpush1.msra.mxu0 0.0
        %1249 = vmatprep.subr.mxu0 0.0
        %1250 = vmatpush1.msra.mxu0 0.0
        %1251 = vmatprep.subr.mxu0 0.0
        %1252 = vmatpush1.msra.mxu0 0.0
        %1253 = vmatprep.subr.mxu0 0.0
        %1254 = vmatpush1.msra.mxu0 0.0
        %1255 = vmatprep.subr.mxu0 0.0
        %1256 = vmatpush1.msra.mxu0 0.0
        %1257 = vmatprep.subr.mxu0 0.0
        %1258 = vmatpush1.msra.mxu0 0.0
        %1259 = vmatprep.subr.mxu0 0.0
        %1260 = vmatpush1.msra.mxu0 0.0
        %1261 = vmatprep.subr.mxu0 0.0
        %1262 = vmatpush1.msra.mxu0 0.0
        %1263 = vmatprep.subr.mxu0 0.0
        %1264 = vmatpush1.msra.mxu0 0.0
        %1265 = vmatprep.subr.mxu0 0.0
        %1266 = vmatpush1.msra.mxu0 0.0
        %1267 = vmatprep.subr.mxu0 0.0
        %1268 = vmatpush1.msra.mxu0 0.0
        %1269 = vmatprep.subr.mxu0 0.0
        %1270 = vmatpush1.msra.mxu0 0.0
        %1271 = vmatprep.subr.mxu0 0.0
        %1272 = vmatpush1.msra.mxu0 0.0
        %1273 = vmatprep.subr.mxu0 0.0
        %1274 = vmatpush1.msra.mxu0 0.0
        %1275 = vmatprep.subr.mxu0 0.0
        %1276 = vmatpush1.msra.mxu0 0.0
        %1277 = vmatprep.subr.mxu0 0.0
        %1278 = vmatpush1.msra.mxu0 0.0
        %1279 = vmatprep.subr.mxu0 0.0
        %1280 = vmatpush1.msra.mxu0 0.0
        %1281 = vmatprep.subr.mxu0 0.0
        %1282 = vmatpush1.msra.mxu0 0.0
        %1283 = vmatprep.subr.mxu0 0.0
        %1284 = vmatpush1.msra.mxu0 0.0
        %1285 = vmatprep.subr.mxu0 0.0
        %1286 = vmatpush1.msra.mxu0 0.0
        %1287 = vmatprep.subr.mxu0 0.0
        %1288 = vmatpush1.msra.mxu0 0.0
        %1289 = vmatprep.subr.mxu0 0.0
        %1290 = vmatpush1.msra.mxu0 0.0
        %1291 = vmatprep.subr.mxu0 0.0
        %1292 = vmatpush1.msra.mxu0 0.0
        %1293 = vmatprep.mubr.f32.mxu0 0.0
        %1294 = vmatmul.mubr.f32.gmra.mrb[0].mxu0 %v1227
        %v1295 = vpop.f32.mrb[0].mxu0
        %v1296 = vadd.f32 %v448, %v1295
        %v1297 = vpop.f32.mrb[0].mxu0
        %1298 = vdwg.mxu0
        %1300 = vrot.lane.b32.xlu0 %v1296, 72
        %v1301 = vpop.permute.xlu0 %1300
        %vm1303 = vcmask 654912
        %1304 = vst.msk [vmem:[%s429] sm:$0xff] %vm1303, %v1301
        %s1305 = scalar_lea.vmem %s362, 80 [#allocation2]
        %v1306 = vld [vmem:[%s1305] sm:$0xff]
        %s1307 = scalar_lea.vmem %s414, 320
        %v1308 = vld [vmem:[%s1307] sm:$0xff]
        %v1309 = vld [vmem:[%s1307 + $0x8] sm:$0xff]
        %v1310 = vld [vmem:[%s1307 + $0x10] sm:$0xff]
        %v1311 = vld [vmem:[%s1307 + $0x18] sm:$0xff]
        %v1313 = vsel %vm455, %v1306, 0
        %1315 = vmatprep.subr.mxu0 0.0
        %1316 = vmatpush1.msra.mxu0 %v1308
        %1317 = vmatprep.subr.mxu0 0.0
        %1318 = vmatpush1.msra.mxu0 %v1309
        %1319 = vmatprep.subr.mxu0 0.0
        %1320 = vmatpush1.msra.mxu0 %v1310
        %1321 = vmatprep.subr.mxu0 0.0
        %1322 = vmatpush1.msra.mxu0 %v1311
        %1323 = vmatprep.subr.mxu0 0.0
        %1324 = vmatpush1.msra.mxu0 0.0
        %1325 = vmatprep.subr.mxu0 0.0
        %1326 = vmatpush1.msra.mxu0 0.0
        %1327 = vmatprep.subr.mxu0 0.0
        %1328 = vmatpush1.msra.mxu0 0.0
        %1329 = vmatprep.subr.mxu0 0.0
        %1330 = vmatpush1.msra.mxu0 0.0
        %1331 = vmatprep.subr.mxu0 0.0
        %1332 = vmatpush1.msra.mxu0 0.0
        %1333 = vmatprep.subr.mxu0 0.0
        %1334 = vmatpush1.msra.mxu0 0.0
        %1335 = vmatprep.subr.mxu0 0.0
        %1336 = vmatpush1.msra.mxu0 0.0
        %1337 = vmatprep.subr.mxu0 0.0
        %1338 = vmatpush1.msra.mxu0 0.0
        %1339 = vmatprep.subr.mxu0 0.0
        %1340 = vmatpush1.msra.mxu0 0.0
        %1341 = vmatprep.subr.mxu0 0.0
        %1342 = vmatpush1.msra.mxu0 0.0
        %1343 = vmatprep.subr.mxu0 0.0
        %1344 = vmatpush1.msra.mxu0 0.0
        %1345 = vmatprep.subr.mxu0 0.0
        %1346 = vmatpush1.msra.mxu0 0.0
        %1347 = vmatprep.subr.mxu0 0.0
        %1348 = vmatpush1.msra.mxu0 0.0
        %1349 = vmatprep.subr.mxu0 0.0
        %1350 = vmatpush1.msra.mxu0 0.0
        %1351 = vmatprep.subr.mxu0 0.0
        %1352 = vmatpush1.msra.mxu0 0.0
        %1353 = vmatprep.subr.mxu0 0.0
        %1354 = vmatpush1.msra.mxu0 0.0
        %1355 = vmatprep.subr.mxu0 0.0
        %1356 = vmatpush1.msra.mxu0 0.0
        %1357 = vmatprep.subr.mxu0 0.0
        %1358 = vmatpush1.msra.mxu0 0.0
        %1359 = vmatprep.subr.mxu0 0.0
        %1360 = vmatpush1.msra.mxu0 0.0
        %1361 = vmatprep.subr.mxu0 0.0
        %1362 = vmatpush1.msra.mxu0 0.0
        %1363 = vmatprep.subr.mxu0 0.0
        %1364 = vmatpush1.msra.mxu0 0.0
        %1365 = vmatprep.subr.mxu0 0.0
        %1366 = vmatpush1.msra.mxu0 0.0
        %1367 = vmatprep.subr.mxu0 0.0
        %1368 = vmatpush1.msra.mxu0 0.0
        %1369 = vmatprep.subr.mxu0 0.0
        %1370 = vmatpush1.msra.mxu0 0.0
        %1371 = vmatprep.subr.mxu0 0.0
        %1372 = vmatpush1.msra.mxu0 0.0
        %1373 = vmatprep.subr.mxu0 0.0
        %1374 = vmatpush1.msra.mxu0 0.0
        %1375 = vmatprep.subr.mxu0 0.0
        %1376 = vmatpush1.msra.mxu0 0.0
        %1377 = vmatprep.subr.mxu0 0.0
        %1378 = vmatpush1.msra.mxu0 0.0
        %1379 = vmatprep.mubr.f32.mxu0 0.0
        %1380 = vmatmul.mubr.f32.gmra.mrb[0].mxu0 %v1313
        %v1381 = vpop.f32.mrb[0].mxu0
        %v1382 = vadd.f32 %v448, %v1381
        %v1383 = vpop.f32.mrb[0].mxu0
        %1384 = vdwg.mxu0
        %1386 = vrot.lane.b32.xlu0 %v1382, 80
        %v1387 = vpop.permute.xlu0 %1386
        %vm1389 = vcmask 720512
        %1390 = vst.msk [vmem:[%s429] sm:$0xff] %vm1389, %v1387
        %s1391 = scalar_lea.vmem %s362, 88 [#allocation2]
        %v1392 = vld [vmem:[%s1391] sm:$0xff]
        %s1393 = scalar_lea.vmem %s414, 352
        %v1394 = vld [vmem:[%s1393] sm:$0xff]
        %v1395 = vld [vmem:[%s1393 + $0x8] sm:$0xff]
        %v1396 = vld [vmem:[%s1393 + $0x10] sm:$0xff]
        %v1397 = vld [vmem:[%s1393 + $0x18] sm:$0xff]
        %v1399 = vsel %vm455, %v1392, 0
        %1401 = vmatprep.subr.mxu0 0.0
        %1402 = vmatpush1.msra.mxu0 %v1394
        %1403 = vmatprep.subr.mxu0 0.0
        %1404 = vmatpush1.msra.mxu0 %v1395
        %1405 = vmatprep.subr.mxu0 0.0
        %1406 = vmatpush1.msra.mxu0 %v1396
        %1407 = vmatprep.subr.mxu0 0.0
        %1408 = vmatpush1.msra.mxu0 %v1397
        %1409 = vmatprep.subr.mxu0 0.0
        %1410 = vmatpush1.msra.mxu0 0.0
        %1411 = vmatprep.subr.mxu0 0.0
        %1412 = vmatpush1.msra.mxu0 0.0
        %1413 = vmatprep.subr.mxu0 0.0
        %1414 = vmatpush1.msra.mxu0 0.0
        %1415 = vmatprep.subr.mxu0 0.0
        %1416 = vmatpush1.msra.mxu0 0.0
        %1417 = vmatprep.subr.mxu0 0.0
        %1418 = vmatpush1.msra.mxu0 0.0
        %1419 = vmatprep.subr.mxu0 0.0
        %1420 = vmatpush1.msra.mxu0 0.0
        %1421 = vmatprep.subr.mxu0 0.0
        %1422 = vmatpush1.msra.mxu0 0.0
        %1423 = vmatprep.subr.mxu0 0.0
        %1424 = vmatpush1.msra.mxu0 0.0
        %1425 = vmatprep.subr.mxu0 0.0
        %1426 = vmatpush1.msra.mxu0 0.0
        %1427 = vmatprep.subr.mxu0 0.0
        %1428 = vmatpush1.msra.mxu0 0.0
        %1429 = vmatprep.subr.mxu0 0.0
        %1430 = vmatpush1.msra.mxu0 0.0
        %1431 = vmatprep.subr.mxu0 0.0
        %1432 = vmatpush1.msra.mxu0 0.0
        %1433 = vmatprep.subr.mxu0 0.0
        %1434 = vmatpush1.msra.mxu0 0.0
        %1435 = vmatprep.subr.mxu0 0.0
        %1436 = vmatpush1.msra.mxu0 0.0
        %1437 = vmatprep.subr.mxu0 0.0
        %1438 = vmatpush1.msra.mxu0 0.0
        %1439 = vmatprep.subr.mxu0 0.0
        %1440 = vmatpush1.msra.mxu0 0.0
        %1441 = vmatprep.subr.mxu0 0.0
        %1442 = vmatpush1.msra.mxu0 0.0
        %1443 = vmatprep.subr.mxu0 0.0
        %1444 = vmatpush1.msra.mxu0 0.0
        %1445 = vmatprep.subr.mxu0 0.0
        %1446 = vmatpush1.msra.mxu0 0.0
        %1447 = vmatprep.subr.mxu0 0.0
        %1448 = vmatpush1.msra.mxu0 0.0
        %1449 = vmatprep.subr.mxu0 0.0
        %1450 = vmatpush1.msra.mxu0 0.0
        %1451 = vmatprep.subr.mxu0 0.0
        %1452 = vmatpush1.msra.mxu0 0.0
        %1453 = vmatprep.subr.mxu0 0.0
        %1454 = vmatpush1.msra.mxu0 0.0
        %1455 = vmatprep.subr.mxu0 0.0
        %1456 = vmatpush1.msra.mxu0 0.0
        %1457 = vmatprep.subr.mxu0 0.0
        %1458 = vmatpush1.msra.mxu0 0.0
        %1459 = vmatprep.subr.mxu0 0.0
        %1460 = vmatpush1.msra.mxu0 0.0
        %1461 = vmatprep.subr.mxu0 0.0
        %1462 = vmatpush1.msra.mxu0 0.0
        %1463 = vmatprep.subr.mxu0 0.0
        %1464 = vmatpush1.msra.mxu0 0.0
        %1465 = vmatprep.mubr.f32.mxu0 0.0
        %1466 = vmatmul.mubr.f32.gmra.mrb[0].mxu0 %v1399
        %v1467 = vpop.f32.mrb[0].mxu0
        %v1468 = vadd.f32 %v448, %v1467
        %v1469 = vpop.f32.mrb[0].mxu0
        %1470 = vdwg.mxu0
        %1472 = vrot.lane.b32.xlu0 %v1468, 88
        %v1473 = vpop.permute.xlu0 %1472
        %vm1475 = vcmask 786112
        %1476 = vst.msk [vmem:[%s429] sm:$0xff] %vm1475, %v1473
        %s1477 = scalar_lea.vmem %s362, 96 [#allocation2]
        %v1478 = vld [vmem:[%s1477] sm:$0xff]
        %s1479 = scalar_lea.vmem %s414, 384
        %v1480 = vld [vmem:[%s1479] sm:$0xff]
        %v1481 = vld [vmem:[%s1479 + $0x8] sm:$0xff]
        %v1482 = vld [vmem:[%s1479 + $0x10] sm:$0xff]
        %v1483 = vld [vmem:[%s1479 + $0x18] sm:$0xff]
        %v1485 = vsel %vm455, %v1478, 0
        %1487 = vmatprep.subr.mxu0 0.0
        %1488 = vmatpush1.msra.mxu0 %v1480
        %1489 = vmatprep.subr.mxu0 0.0
        %1490 = vmatpush1.msra.mxu0 %v1481
        %1491 = vmatprep.subr.mxu0 0.0
        %1492 = vmatpush1.msra.mxu0 %v1482
        %1493 = vmatprep.subr.mxu0 0.0
        %1494 = vmatpush1.msra.mxu0 %v1483
        %1495 = vmatprep.subr.mxu0 0.0
        %1496 = vmatpush1.msra.mxu0 0.0
        %1497 = vmatprep.subr.mxu0 0.0
        %1498 = vmatpush1.msra.mxu0 0.0
        %1499 = vmatprep.subr.mxu0 0.0
        %1500 = vmatpush1.msra.mxu0 0.0
        %1501 = vmatprep.subr.mxu0 0.0
        %1502 = vmatpush1.msra.mxu0 0.0
        %1503 = vmatprep.subr.mxu0 0.0
        %1504 = vmatpush1.msra.mxu0 0.0
        %1505 = vmatprep.subr.mxu0 0.0
        %1506 = vmatpush1.msra.mxu0 0.0
        %1507 = vmatprep.subr.mxu0 0.0
        %1508 = vmatpush1.msra.mxu0 0.0
        %1509 = vmatprep.subr.mxu0 0.0
        %1510 = vmatpush1.msra.mxu0 0.0
        %1511 = vmatprep.subr.mxu0 0.0
        %1512 = vmatpush1.msra.mxu0 0.0
        %1513 = vmatprep.subr.mxu0 0.0
        %1514 = vmatpush1.msra.mxu0 0.0
        %1515 = vmatprep.subr.mxu0 0.0
        %1516 = vmatpush1.msra.mxu0 0.0
        %1517 = vmatprep.subr.mxu0 0.0
        %1518 = vmatpush1.msra.mxu0 0.0
        %1519 = vmatprep.subr.mxu0 0.0
        %1520 = vmatpush1.msra.mxu0 0.0
        %1521 = vmatprep.subr.mxu0 0.0
        %1522 = vmatpush1.msra.mxu0 0.0
        %1523 = vmatprep.subr.mxu0 0.0
        %1524 = vmatpush1.msra.mxu0 0.0
        %1525 = vmatprep.subr.mxu0 0.0
        %1526 = vmatpush1.msra.mxu0 0.0
        %1527 = vmatprep.subr.mxu0 0.0
        %1528 = vmatpush1.msra.mxu0 0.0
        %1529 = vmatprep.subr.mxu0 0.0
        %1530 = vmatpush1.msra.mxu0 0.0
        %1531 = vmatprep.subr.mxu0 0.0
        %1532 = vmatpush1.msra.mxu0 0.0
        %1533 = vmatprep.subr.mxu0 0.0
        %1534 = vmatpush1.msra.mxu0 0.0
        %1535 = vmatprep.subr.mxu0 0.0
        %1536 = vmatpush1.msra.mxu0 0.0
        %1537 = vmatprep.subr.mxu0 0.0
        %1538 = vmatpush1.msra.mxu0 0.0
        %1539 = vmatprep.subr.mxu0 0.0
        %1540 = vmatpush1.msra.mxu0 0.0
        %1541 = vmatprep.subr.mxu0 0.0
        %1542 = vmatpush1.msra.mxu0 0.0
        %1543 = vmatprep.subr.mxu0 0.0
        %1544 = vmatpush1.msra.mxu0 0.0
        %1545 = vmatprep.subr.mxu0 0.0
        %1546 = vmatpush1.msra.mxu0 0.0
        %1547 = vmatprep.subr.mxu0 0.0
        %1548 = vmatpush1.msra.mxu0 0.0
        %1549 = vmatprep.subr.mxu0 0.0
        %1550 = vmatpush1.msra.mxu0 0.0
        %1551 = vmatprep.mubr.f32.mxu0 0.0
        %1552 = vmatmul.mubr.f32.gmra.mrb[0].mxu0 %v1485
        %v1553 = vpop.f32.mrb[0].mxu0
        %v1554 = vadd.f32 %v448, %v1553
        %v1555 = vpop.f32.mrb[0].mxu0
        %1556 = vdwg.mxu0
        %1558 = vrot.lane.b32.xlu0 %v1554, 96
        %v1559 = vpop.permute.xlu0 %1558
        %vm1561 = vcmask 851712
        %1562 = vst.msk [vmem:[%s429] sm:$0xff] %vm1561, %v1559
        %s1563 = scalar_lea.vmem %s362, 104 [#allocation2]
        %v1564 = vld [vmem:[%s1563] sm:$0xff]
        %s1565 = scalar_lea.vmem %s414, 416
        %v1566 = vld [vmem:[%s1565] sm:$0xff]
        %v1567 = vld [vmem:[%s1565 + $0x8] sm:$0xff]
        %v1568 = vld [vmem:[%s1565 + $0x10] sm:$0xff]
        %v1569 = vld [vmem:[%s1565 + $0x18] sm:$0xff]
        %v1571 = vsel %vm455, %v1564, 0
        %1573 = vmatprep.subr.mxu0 0.0
        %1574 = vmatpush1.msra.mxu0 %v1566
        %1575 = vmatprep.subr.mxu0 0.0
        %1576 = vmatpush1.msra.mxu0 %v1567
        %1577 = vmatprep.subr.mxu0 0.0
        %1578 = vmatpush1.msra.mxu0 %v1568
        %1579 = vmatprep.subr.mxu0 0.0
        %1580 = vmatpush1.msra.mxu0 %v1569
        %1581 = vmatprep.subr.mxu0 0.0
        %1582 = vmatpush1.msra.mxu0 0.0
        %1583 = vmatprep.subr.mxu0 0.0
        %1584 = vmatpush1.msra.mxu0 0.0
        %1585 = vmatprep.subr.mxu0 0.0
        %1586 = vmatpush1.msra.mxu0 0.0
        %1587 = vmatprep.subr.mxu0 0.0
        %1588 = vmatpush1.msra.mxu0 0.0
        %1589 = vmatprep.subr.mxu0 0.0
        %1590 = vmatpush1.msra.mxu0 0.0
        %1591 = vmatprep.subr.mxu0 0.0
        %1592 = vmatpush1.msra.mxu0 0.0
        %1593 = vmatprep.subr.mxu0 0.0
        %1594 = vmatpush1.msra.mxu0 0.0
        %1595 = vmatprep.subr.mxu0 0.0
        %1596 = vmatpush1.msra.mxu0 0.0
        %1597 = vmatprep.subr.mxu0 0.0
        %1598 = vmatpush1.msra.mxu0 0.0
        %1599 = vmatprep.subr.mxu0 0.0
        %1600 = vmatpush1.msra.mxu0 0.0
        %1601 = vmatprep.subr.mxu0 0.0
        %1602 = vmatpush1.msra.mxu0 0.0
        %1603 = vmatprep.subr.mxu0 0.0
        %1604 = vmatpush1.msra.mxu0 0.0
        %1605 = vmatprep.subr.mxu0 0.0
        %1606 = vmatpush1.msra.mxu0 0.0
        %1607 = vmatprep.subr.mxu0 0.0
        %1608 = vmatpush1.msra.mxu0 0.0
        %1609 = vmatprep.subr.mxu0 0.0
        %1610 = vmatpush1.msra.mxu0 0.0
        %1611 = vmatprep.subr.mxu0 0.0
        %1612 = vmatpush1.msra.mxu0 0.0
        %1613 = vmatprep.subr.mxu0 0.0
        %1614 = vmatpush1.msra.mxu0 0.0
        %1615 = vmatprep.subr.mxu0 0.0
        %1616 = vmatpush1.msra.mxu0 0.0
        %1617 = vmatprep.subr.mxu0 0.0
        %1618 = vmatpush1.msra.mxu0 0.0
        %1619 = vmatprep.subr.mxu0 0.0
        %1620 = vmatpush1.msra.mxu0 0.0
        %1621 = vmatprep.subr.mxu0 0.0
        %1622 = vmatpush1.msra.mxu0 0.0
        %1623 = vmatprep.subr.mxu0 0.0
        %1624 = vmatpush1.msra.mxu0 0.0
        %1625 = vmatprep.subr.mxu0 0.0
        %1626 = vmatpush1.msra.mxu0 0.0
        %1627 = vmatprep.subr.mxu0 0.0
        %1628 = vmatpush1.msra.mxu0 0.0
        %1629 = vmatprep.subr.mxu0 0.0
        %1630 = vmatpush1.msra.mxu0 0.0
        %1631 = vmatprep.subr.mxu0 0.0
        %1632 = vmatpush1.msra.mxu0 0.0
        %1633 = vmatprep.subr.mxu0 0.0
        %1634 = vmatpush1.msra.mxu0 0.0
        %1635 = vmatprep.subr.mxu0 0.0
        %1636 = vmatpush1.msra.mxu0 0.0
        %1637 = vmatprep.mubr.f32.mxu0 0.0
        %1638 = vmatmul.mubr.f32.gmra.mrb[0].mxu0 %v1571
        %v1639 = vpop.f32.mrb[0].mxu0
        %v1640 = vadd.f32 %v448, %v1639
        %v1641 = vpop.f32.mrb[0].mxu0
        %1642 = vdwg.mxu0
        %1644 = vrot.lane.b32.xlu0 %v1640, 104
        %v1645 = vpop.permute.xlu0 %1644
        %vm1647 = vcmask 917312
        %1648 = vst.msk [vmem:[%s429] sm:$0xff] %vm1647, %v1645
        %s1649 = scalar_lea.vmem %s362, 112 [#allocation2]
        %v1650 = vld [vmem:[%s1649] sm:$0xff]
        %s1651 = scalar_lea.vmem %s414, 448
        %v1652 = vld [vmem:[%s1651] sm:$0xff]
        %v1653 = vld [vmem:[%s1651 + $0x8] sm:$0xff]
        %v1654 = vld [vmem:[%s1651 + $0x10] sm:$0xff]
        %v1655 = vld [vmem:[%s1651 + $0x18] sm:$0xff]
        %v1657 = vsel %vm455, %v1650, 0
        %1659 = vmatprep.subr.mxu0 0.0
        %1660 = vmatpush1.msra.mxu0 %v1652
        %1661 = vmatprep.subr.mxu0 0.0
        %1662 = vmatpush1.msra.mxu0 %v1653
        %1663 = vmatprep.subr.mxu0 0.0
        %1664 = vmatpush1.msra.mxu0 %v1654
        %1665 = vmatprep.subr.mxu0 0.0
        %1666 = vmatpush1.msra.mxu0 %v1655
        %1667 = vmatprep.subr.mxu0 0.0
        %1668 = vmatpush1.msra.mxu0 0.0
        %1669 = vmatprep.subr.mxu0 0.0
        %1670 = vmatpush1.msra.mxu0 0.0
        %1671 = vmatprep.subr.mxu0 0.0
        %1672 = vmatpush1.msra.mxu0 0.0
        %1673 = vmatprep.subr.mxu0 0.0
        %1674 = vmatpush1.msra.mxu0 0.0
        %1675 = vmatprep.subr.mxu0 0.0
        %1676 = vmatpush1.msra.mxu0 0.0
        %1677 = vmatprep.subr.mxu0 0.0
        %1678 = vmatpush1.msra.mxu0 0.0
        %1679 = vmatprep.subr.mxu0 0.0
        %1680 = vmatpush1.msra.mxu0 0.0
        %1681 = vmatprep.subr.mxu0 0.0
        %1682 = vmatpush1.msra.mxu0 0.0
        %1683 = vmatprep.subr.mxu0 0.0
        %1684 = vmatpush1.msra.mxu0 0.0
        %1685 = vmatprep.subr.mxu0 0.0
        %1686 = vmatpush1.msra.mxu0 0.0
        %1687 = vmatprep.subr.mxu0 0.0
        %1688 = vmatpush1.msra.mxu0 0.0
        %1689 = vmatprep.subr.mxu0 0.0
        %1690 = vmatpush1.msra.mxu0 0.0
        %1691 = vmatprep.subr.mxu0 0.0
        %1692 = vmatpush1.msra.mxu0 0.0
        %1693 = vmatprep.subr.mxu0 0.0
        %1694 = vmatpush1.msra.mxu0 0.0
        %1695 = vmatprep.subr.mxu0 0.0
        %1696 = vmatpush1.msra.mxu0 0.0
        %1697 = vmatprep.subr.mxu0 0.0
        %1698 = vmatpush1.msra.mxu0 0.0
        %1699 = vmatprep.subr.mxu0 0.0
        %1700 = vmatpush1.msra.mxu0 0.0
        %1701 = vmatprep.subr.mxu0 0.0
        %1702 = vmatpush1.msra.mxu0 0.0
        %1703 = vmatprep.subr.mxu0 0.0
        %1704 = vmatpush1.msra.mxu0 0.0
        %1705 = vmatprep.subr.mxu0 0.0
        %1706 = vmatpush1.msra.mxu0 0.0
        %1707 = vmatprep.subr.mxu0 0.0
        %1708 = vmatpush1.msra.mxu0 0.0
        %1709 = vmatprep.subr.mxu0 0.0
        %1710 = vmatpush1.msra.mxu0 0.0
        %1711 = vmatprep.subr.mxu0 0.0
        %1712 = vmatpush1.msra.mxu0 0.0
        %1713 = vmatprep.subr.mxu0 0.0
        %1714 = vmatpush1.msra.mxu0 0.0
        %1715 = vmatprep.subr.mxu0 0.0
        %1716 = vmatpush1.msra.mxu0 0.0
        %1717 = vmatprep.subr.mxu0 0.0
        %1718 = vmatpush1.msra.mxu0 0.0
        %1719 = vmatprep.subr.mxu0 0.0
        %1720 = vmatpush1.msra.mxu0 0.0
        %1721 = vmatprep.subr.mxu0 0.0
        %1722 = vmatpush1.msra.mxu0 0.0
        %1723 = vmatprep.mubr.f32.mxu0 0.0
        %1724 = vmatmul.mubr.f32.gmra.mrb[0].mxu0 %v1657
        %v1725 = vpop.f32.mrb[0].mxu0
        %v1726 = vadd.f32 %v448, %v1725
        %v1727 = vpop.f32.mrb[0].mxu0
        %1728 = vdwg.mxu0
        %1730 = vrot.lane.b32.xlu0 %v1726, 112
        %v1731 = vpop.permute.xlu0 %1730
        %vm1733 = vcmask 982912
        %1734 = vst.msk [vmem:[%s429] sm:$0xff] %vm1733, %v1731
        %s1735 = scalar_lea.vmem %s362, 120 [#allocation2]
        %v1736 = vld [vmem:[%s1735] sm:$0xff]
        %s1737 = scalar_lea.vmem %s414, 480
        %v1738 = vld [vmem:[%s1737] sm:$0xff]
        %v1739 = vld [vmem:[%s1737 + $0x8] sm:$0xff]
        %v1740 = vld [vmem:[%s1737 + $0x10] sm:$0xff]
        %v1741 = vld [vmem:[%s1737 + $0x18] sm:$0xff]
        %v1743 = vsel %vm455, %v1736, 0
        %1745 = vmatprep.subr.mxu0 0.0
        %1746 = vmatpush1.msra.mxu0 %v1738
        %1747 = vmatprep.subr.mxu0 0.0
        %1748 = vmatpush1.msra.mxu0 %v1739
        %1749 = vmatprep.subr.mxu0 0.0
        %1750 = vmatpush1.msra.mxu0 %v1740
        %1751 = vmatprep.subr.mxu0 0.0
        %1752 = vmatpush1.msra.mxu0 %v1741
        %1753 = vmatprep.subr.mxu0 0.0
        %1754 = vmatpush1.msra.mxu0 0.0
        %1755 = vmatprep.subr.mxu0 0.0
        %1756 = vmatpush1.msra.mxu0 0.0
        %1757 = vmatprep.subr.mxu0 0.0
        %1758 = vmatpush1.msra.mxu0 0.0
        %1759 = vmatprep.subr.mxu0 0.0
        %1760 = vmatpush1.msra.mxu0 0.0
        %1761 = vmatprep.subr.mxu0 0.0
        %1762 = vmatpush1.msra.mxu0 0.0
        %1763 = vmatprep.subr.mxu0 0.0
        %1764 = vmatpush1.msra.mxu0 0.0
        %1765 = vmatprep.subr.mxu0 0.0
        %1766 = vmatpush1.msra.mxu0 0.0
        %1767 = vmatprep.subr.mxu0 0.0
        %1768 = vmatpush1.msra.mxu0 0.0
        %1769 = vmatprep.subr.mxu0 0.0
        %1770 = vmatpush1.msra.mxu0 0.0
        %1771 = vmatprep.subr.mxu0 0.0
        %1772 = vmatpush1.msra.mxu0 0.0
        %1773 = vmatprep.subr.mxu0 0.0
        %1774 = vmatpush1.msra.mxu0 0.0
        %1775 = vmatprep.subr.mxu0 0.0
        %1776 = vmatpush1.msra.mxu0 0.0
        %1777 = vmatprep.subr.mxu0 0.0
        %1778 = vmatpush1.msra.mxu0 0.0
        %1779 = vmatprep.subr.mxu0 0.0
        %1780 = vmatpush1.msra.mxu0 0.0
        %1781 = vmatprep.subr.mxu0 0.0
        %1782 = vmatpush1.msra.mxu0 0.0
        %1783 = vmatprep.subr.mxu0 0.0
        %1784 = vmatpush1.msra.mxu0 0.0
        %1785 = vmatprep.subr.mxu0 0.0
        %1786 = vmatpush1.msra.mxu0 0.0
        %1787 = vmatprep.subr.mxu0 0.0
        %1788 = vmatpush1.msra.mxu0 0.0
        %1789 = vmatprep.subr.mxu0 0.0
        %1790 = vmatpush1.msra.mxu0 0.0
        %1791 = vmatprep.subr.mxu0 0.0
        %1792 = vmatpush1.msra.mxu0 0.0
        %1793 = vmatprep.subr.mxu0 0.0
        %1794 = vmatpush1.msra.mxu0 0.0
        %1795 = vmatprep.subr.mxu0 0.0
        %1796 = vmatpush1.msra.mxu0 0.0
        %1797 = vmatprep.subr.mxu0 0.0
        %1798 = vmatpush1.msra.mxu0 0.0
        %1799 = vmatprep.subr.mxu0 0.0
        %1800 = vmatpush1.msra.mxu0 0.0
        %1801 = vmatprep.subr.mxu0 0.0
        %1802 = vmatpush1.msra.mxu0 0.0
        %1803 = vmatprep.subr.mxu0 0.0
        %1804 = vmatpush1.msra.mxu0 0.0
        %1805 = vmatprep.subr.mxu0 0.0
        %1806 = vmatpush1.msra.mxu0 0.0
        %1807 = vmatprep.subr.mxu0 0.0
        %1808 = vmatpush1.msra.mxu0 0.0
        %1809 = vmatprep.mubr.f32.mxu0 0.0
        %1810 = vmatmul.mubr.f32.gmra.mrb[0].mxu0 %v1743
        %v1811 = vpop.f32.mrb[0].mxu0
        %v1812 = vadd.f32 %v448, %v1811
        %v1813 = vpop.f32.mrb[0].mxu0
        %1814 = vdwg.mxu0
        %1816 = vrot.lane.b32.xlu0 %v1812, 120
        %v1817 = vpop.permute.xlu0 %1816
        %vm1819 = vcmask 1048512
        %1820 = vst.msk [vmem:[%s429] sm:$0xff] %vm1819, %v1817
        %v1821 = vld [vmem:[%s397] sm:$0xff]
        %v1822 = vld [vmem:[%s429] sm:$0xff]
        %v1823 = vld [vmem:[%s420] sm:$0xff]
        %v1824 = vld [vmem:[%s420 + $0x8] sm:$0xff]
        %v1825 = vld [vmem:[%s420 + $0x10] sm:$0xff]
        %v1826 = vld [vmem:[%s420 + $0x18] sm:$0xff]
        %v1827 = vld [vmem:[%s420 + $0x20] sm:$0xff]
        %v1828 = vld [vmem:[%s420 + $0x28] sm:$0xff]
        %v1829 = vld [vmem:[%s420 + $0x30] sm:$0xff]
        %v1830 = vld [vmem:[%s420 + $0x38] sm:$0xff]
        %v1831 = vld [vmem:[%s420 + $0x40] sm:$0xff]
        %v1832 = vld [vmem:[%s420 + $0x48] sm:$0xff]
        %v1833 = vld [vmem:[%s420 + $0x50] sm:$0xff]
        %v1834 = vld [vmem:[%s420 + $0x58] sm:$0xff]
        %v1835 = vld [vmem:[%s420 + $0x60] sm:$0xff]
        %v1836 = vld [vmem:[%s420 + $0x68] sm:$0xff]
        %v1837 = vld [vmem:[%s420 + $0x70] sm:$0xff]
        %v1838 = vld [vmem:[%s420 + $0x78] sm:$0xff]
        %1839 = vmatprep.subr.mxu0 0.0
        %1840 = vmatpush1.msra.mxu0 %v1823
        %1841 = vmatprep.subr.mxu0 0.0
        %1842 = vmatpush1.msra.mxu0 %v1824
        %1843 = vmatprep.subr.mxu0 0.0
        %1844 = vmatpush1.msra.mxu0 %v1825
        %1845 = vmatprep.subr.mxu0 0.0
        %1846 = vmatpush1.msra.mxu0 %v1826
        %1847 = vmatprep.subr.mxu0 0.0
        %1848 = vmatpush1.msra.mxu0 %v1827
        %1849 = vmatprep.subr.mxu0 0.0
        %1850 = vmatpush1.msra.mxu0 %v1828
        %1851 = vmatprep.subr.mxu0 0.0
        %1852 = vmatpush1.msra.mxu0 %v1829
        %1853 = vmatprep.subr.mxu0 0.0
        %1854 = vmatpush1.msra.mxu0 %v1830
        %1855 = vmatprep.subr.mxu0 0.0
        %1856 = vmatpush1.msra.mxu0 %v1831
        %1857 = vmatprep.subr.mxu0 0.0
        %1858 = vmatpush1.msra.mxu0 %v1832
        %1859 = vmatprep.subr.mxu0 0.0
        %1860 = vmatpush1.msra.mxu0 %v1833
        %1861 = vmatprep.subr.mxu0 0.0
        %1862 = vmatpush1.msra.mxu0 %v1834
        %1863 = vmatprep.subr.mxu0 0.0
        %1864 = vmatpush1.msra.mxu0 %v1835
        %1865 = vmatprep.subr.mxu0 0.0
        %1866 = vmatpush1.msra.mxu0 %v1836
        %1867 = vmatprep.subr.mxu0 0.0
        %1868 = vmatpush1.msra.mxu0 %v1837
        %1869 = vmatprep.subr.mxu0 0.0
        %1870 = vmatpush1.msra.mxu0 %v1838
        %1871 = vmatprep.subr.mxu0 0.0
        %1872 = vmatpush1.msra.mxu0 0.0
        %1873 = vmatprep.subr.mxu0 0.0
        %1874 = vmatpush1.msra.mxu0 0.0
        %1875 = vmatprep.subr.mxu0 0.0
        %1876 = vmatpush1.msra.mxu0 0.0
        %1877 = vmatprep.subr.mxu0 0.0
        %1878 = vmatpush1.msra.mxu0 0.0
        %1879 = vmatprep.subr.mxu0 0.0
        %1880 = vmatpush1.msra.mxu0 0.0
        %1881 = vmatprep.subr.mxu0 0.0
        %1882 = vmatpush1.msra.mxu0 0.0
        %1883 = vmatprep.subr.mxu0 0.0
        %1884 = vmatpush1.msra.mxu0 0.0
        %1885 = vmatprep.subr.mxu0 0.0
        %1886 = vmatpush1.msra.mxu0 0.0
        %1887 = vmatprep.subr.mxu0 0.0
        %1888 = vmatpush1.msra.mxu0 0.0
        %1889 = vmatprep.subr.mxu0 0.0
        %1890 = vmatpush1.msra.mxu0 0.0
        %1891 = vmatprep.subr.mxu0 0.0
        %1892 = vmatpush1.msra.mxu0 0.0
        %1893 = vmatprep.subr.mxu0 0.0
        %1894 = vmatpush1.msra.mxu0 0.0
        %1895 = vmatprep.subr.mxu0 0.0
        %1896 = vmatpush1.msra.mxu0 0.0
        %1897 = vmatprep.subr.mxu0 0.0
        %1898 = vmatpush1.msra.mxu0 0.0
        %1899 = vmatprep.subr.mxu0 0.0
        %1900 = vmatpush1.msra.mxu0 0.0
        %1901 = vmatprep.subr.mxu0 0.0
        %1902 = vmatpush1.msra.mxu0 0.0
        %1903 = vmatprep.mubr.f32.mxu0 0.0
        %1904 = vmatmul.mubr.f32.gmra.mrb[0].mxu0 %v1822
        %v1905 = vpop.f32.mrb[0].mxu0
        %v1906 = vadd.f32 0.0, %v1905
        %v1907 = vpop.f32.mrb[0].mxu0
        %1908 = vdwg.mxu0
        %v1909 = vadd.f32 %v1821, %v1906
        %1910 = vst.msk [vmem:[%s397] sm:$0xff] %vm455, %v1909
        %s1911 = sand.u32 %s163, 1
        %s1912 = scalar_lea.sflag [#allocation4], %s1911
        %s1913 = sand.u32 %s163, 1
        %s1914 = smul.addr %s1913, 8
        %s1915 = scalar_lea.vmem [#allocation3], %s1914
        %p1916 = scmp.lt.s32.totalorder %s25, 1
        %s1917 = scalar_select %p1916, %s25, 1
        %p1918 = scmp.lt.s32.totalorder %s26, 1
        %s1919 = scalar_select %p1918, %s26, 1
        %s1920 = smul.addr %s1917, 2
        %s1921 = sadd.s32 %s1919, %s1920
        %s1922 = smul.addr %s1921, 8
        %s1923 = scalar_lea.vmem %s6, %s1922
        // Predicated region
        $region83: #{sparse_autoencoder_forward.1} parent=73 // pred_check
          %p1924 = pneg %p173
        $region84: #{sparse_autoencoder_forward.1} parent=73 // pred_check_branch
          %1926 = sbr.rel (%p1924) target = $region86
        $region85: #{sparse_autoencoder_forward.1} parent=73 // pred_region
          %s1928 = ssub.s32 128, 128
          %1929 = vsyncadd %s1912, %s1928
          %s1930 = smul.addr %s25, 128
          %s1931 = scalar_lea.hbm %s5, %s1930
          %s1933 = sshll.u32 %s1915, 4
          %s1934 = int_to_ptr.vmem [resolvable:$true] %s1933
          %1936 = dma.vmem_to_hbm [thread:$0]  %s1934, 128, %s1931, %s1912
        $region86: #{sparse_autoencoder_forward.1} parent=73 // pred_fallthru
          _
        // Predicated region
        $region87: #{sparse_autoencoder_forward.1} parent=73 // pred_check
          %p1937 = pneg %p201
        $region88: #{sparse_autoencoder_forward.1} parent=73 // pred_check_branch
          %1939 = sbr.rel (%p1937) target = $region90
        $region89: #{sparse_autoencoder_forward.1} parent=73 // pred_region
          _
        $region90: #{sparse_autoencoder_forward.1} parent=73 // pred_fallthru
          _
      $region74: #{sparse_autoencoder_forward.1} parent=5 // pred_fallthru
        _
      %p1940 = scmp.le.s32.totalorder 2, %s16
      // Predicated region
      $region91: #{sparse_autoencoder_forward.1} parent=5 // pred_check
        %p1941 = pneg %p1940
      $region92: #{sparse_autoencoder_forward.1} parent=5 // pred_check_branch
        %1943 = sbr.rel (%p1941) target = $region94
      $region93: #{sparse_autoencoder_forward.1} parent=5 // pred_region
        %s1944 = ssub.s32 %s16, 2
        // Predicated region
        $region95: #{sparse_autoencoder_forward.1} parent=93 // pred_check
          %p1945 = pneg %p179
        $region96: #{sparse_autoencoder_forward.1} parent=93 // pred_check_branch
          %1947 = sbr.rel (%p1945) target = $region98
        $region97: #{sparse_autoencoder_forward.1} parent=93 // pred_region
          %s1948 = sand.u32 %s164, 1
          %s1949 = scalar_lea.sflag [#allocation4], %s1948
          %s1950 = sand.u32 %s164, 1
          %s1951 = smul.addr %s1950, 8
          %s1952 = scalar_lea.vmem [#allocation3], %s1951
          %1953 = dma.done %s1949, 128
        $region98: #{sparse_autoencoder_forward.1} parent=93 // pred_fallthru
          _
        // Predicated region
        $region99: #{sparse_autoencoder_forward.1} parent=93 // pred_check
          %p1954 = pneg %p207
        $region100: #{sparse_autoencoder_forward.1} parent=93 // pred_check_branch
          %1956 = sbr.rel (%p1954) target = $region102
        $region101: #{sparse_autoencoder_forward.1} parent=93 // pred_region
          %p1957 = scmp.lt.s32.totalorder %s27, 1
          %s1958 = scalar_select %p1957, %s27, 1
          %p1959 = scmp.lt.s32.totalorder %s28, 1
          %s1960 = scalar_select %p1959, %s28, 1
          %s1961 = smul.addr %s1958, 2
          %s1962 = sadd.s32 %s1960, %s1961
          %s1963 = smul.addr %s1962, 8
          %s1964 = scalar_lea.vmem %s6, %s1963
        $region102: #{sparse_autoencoder_forward.1} parent=93 // pred_fallthru
          _
      $region94: #{sparse_autoencoder_forward.1} parent=5 // pred_fallthru
        _
    $region6: #{sparse_autoencoder_forward.1} parent=1 // loop_footer
      %s20 = sadd.s32 1, %s16
    $region7: #{sparse_autoencoder_forward.1} parent=1 // loop_footer_branch
      %15 = sbr.rel target = $region3
    $region8: #{sparse_autoencoder_forward.1} parent=1 // loop_exit
      _
    %1965 = vsyncpa [#allocation4], 1
    %s1966 = scalar_lea.sflag [#allocation4], 1
    %1967 = vsyncpa %s1966, 1

</llo_original>
